<compile_context>
chip_gen: v7x
topology: tpu7x:2x2x1
jax: 0.10.0
libtpu: 0.0.40
codegen_flags: <defaults>
</compile_context>

<pallas_src>
import math
import functools

import jax
import jax.numpy as jnp
from jax.experimental import pallas as pl
from jax.experimental.pallas import tpu as pltpu

_BF16 = jnp.bfloat16
_F32 = jnp.float32


# ---------------------------------------------------------------------------
# Kernels
# ---------------------------------------------------------------------------
def _qkv_kernel(x_ref, w_ref, b_ref, q_ref, k_ref, v_ref, *, d_model):
    """Row-tiled fused Q/K/V projection: one (tm, D) @ (D, 3D) bf16 MXU matmul.

    The 1/sqrt(d_k) attention scale is pre-folded into the Q third of W/b
    (done once at parameter-prep time, outside the jitted forward).
    """
    x = x_ref[...].astype(_BF16)                                     # MXU operands bf16
    qkv = jnp.dot(x, w_ref[...], preferred_element_type=_F32)       # f32 accumulate
    qkv = qkv + b_ref[...]
    q_ref[...] = qkv[:, 0 * d_model:1 * d_model].astype(q_ref.dtype)
    k_ref[...] = qkv[:, 1 * d_model:2 * d_model].astype(k_ref.dtype)
    v_ref[...] = qkv[:, 2 * d_model:3 * d_model].astype(v_ref.dtype)


def _attn_kernel(q_ref, k_ref, v_ref, o_ref):
    """One (batch, head) attention tile; q is pre-scaled; softmax stats in f32."""
    q = q_ref[...]                                                   # (S, d_k) bf16
    k = k_ref[...]
    v = v_ref[...]
    # Contract the last axes directly -> no explicit K transpose (MXU handles it).
    s = jnp.einsum("qd,kd->qk", q, k, preferred_element_type=_F32)   # (S, S) f32
    s = s - jnp.max(s, axis=-1, keepdims=True)
    p = jnp.exp(s)
    denom = jnp.sum(p, axis=-1, keepdims=True)
    o = jnp.dot(p.astype(_BF16), v, preferred_element_type=_F32)     # (S, d_k) f32
    # Normalize AFTER the PV matmul: scales an (S, d_k) tensor, not (S, S).
    o_ref[...] = (o * pl.reciprocal(denom, approx=True)).astype(o_ref.dtype)


def _post_kernel(x_ref, a_ref, wo_ref, bo_ref, lw_ref, lb_ref,
                 w1_ref, b1_ref, w2_ref, b2_ref, out_ref):
    """Row-tiled: o_proj + residual + LN + FFN(GELU) + residual + LN (fused).

    Matmul operands bf16 (f32 accumulation); all elementwise / LN / GELU math
    stays f32.  The (tm, 4D) FFN intermediate never leaves VMEM.
    """
    lw = lw_ref[...]    # shared LayerNorm affine, loaded once (used twice)
    lb = lb_ref[...]

    def _ln(h):
        mu = jnp.mean(h, axis=-1, keepdims=True)
        var = jnp.mean(jnp.square(h - mu), axis=-1, keepdims=True)
        return (h - mu) * jax.lax.rsqrt(var + 1e-5) * lw + lb

    def _gelu(h):       # exact erf GELU (torch.nn.GELU default)
        return 0.5 * h * (1.0 + jax.lax.erf(h * (1.0 / math.sqrt(2.0))))

    x = x_ref[...]                                                          # (tm, D) f32
    o = jnp.dot(a_ref[...], wo_ref[...], preferred_element_type=_F32) + bo_ref[...]
    # dropout(p=0.1) -> identity (eval-mode semantics)
    h1 = _ln(x + o)
    f = jnp.dot(h1.astype(_BF16), w1_ref[...], preferred_element_type=_F32) + b1_ref[...]
    f = _gelu(f)
    f = jnp.dot(f.astype(_BF16), w2_ref[...], preferred_element_type=_F32) + b2_ref[...]
    out_ref[...] = _ln(h1 + f)


# ---------------------------------------------------------------------------
# Wrapper helpers
# ---------------------------------------------------------------------------
def _const_spec(shape):
    """Constant-index (weight/bias) block: single-buffered to halve weight VMEM."""
    n = len(shape)
    return pl.BlockSpec(shape, lambda *_, _n=n: (0,) * _n,
                        pipeline_mode=pl.Buffered(1))


def _row_tile(rows, preferred=256):
    """Largest MXU-friendly row tile dividing `rows`; prefer >=2 grid steps so
    v7x's two TensorCores both get work."""
    for t in (preferred, 128, 64, 32, 16, 8):
        if rows % t == 0 and rows // t >= 2:
            return t
    for t in (preferred, 128, 64, 32, 16, 8):
        if rows % t == 0:
            return t
    return rows


def _vmem_limit_bytes():
    """Explicit scoped-VMEM budget (defaults of 16/32 MiB are too small for real D/S)."""
    try:
        cap = pltpu.get_tpu_info().vmem_capacity_bytes
    except Exception:
        cap = 64 * 1024 * 1024
    return int(cap * 7 // 8)      # ~112 MiB on v5e/v6e, ~56 MiB on v7x


def prepare_params(params, num_heads):
    """One-time parameter prep (OUTSIDE jit): fold 1/sqrt(d_k) into the Q columns,
    concat Q|K|V weights, and cast all matmul weights to bf16.  Biases and the
    LayerNorm affine stay f32 (added after f32 accumulation)."""
    D = params["wq"].shape[0]
    scale = 1.0 / math.sqrt(D // num_heads)
    w_qkv = jnp.concatenate(
        [params["wq"] * scale, params["wk"], params["wv"]], axis=1).astype(_BF16)
    b_qkv = jnp.concatenate(
        [params["bq"] * scale, params["bk"], params["bv"]], axis=1).astype(_F32)
    return dict(
        w_qkv=w_qkv, b_qkv=b_qkv,
        wo=params["wo"].astype(_BF16), bo=params["bo"].astype(_F32),
        w1=params["w1"].astype(_BF16), b1=params["b1"].astype(_F32),
        w2=params["w2"].astype(_BF16), b2=params["b2"].astype(_F32),
        ln_w=params["ln_w"].astype(_F32), ln_b=params["ln_b"].astype(_F32))


# ---------------------------------------------------------------------------
# Forward
# ---------------------------------------------------------------------------
@functools.partial(jax.jit, static_argnames=("num_heads",))
def transformer_encode_block(x, prepped, num_heads):
    B, S, D = x.shape
    H = num_heads
    d_k = D // H
    dff = 4 * D
    rows = B * S
    tm = _row_tile(rows)
    vmem_limit = _vmem_limit_bytes()

    x2 = x.reshape(rows, D)
    row_spec = pl.BlockSpec((tm, D), lambda i: (i, 0))

    # --- fused Q/K/V projection (row-tiled, bf16 activations out) -------------
    qkv_cost = pl.CostEstimate(
        flops=int(2 * rows * D * 3 * D), transcendentals=0,
        bytes_accessed=int(rows * D * 4 + 3 * D * D * 2 + 3 * rows * D * 2))
    q, k, v = pl.pallas_call(
        functools.partial(_qkv_kernel, d_model=D),
        grid=(rows // tm,),
        in_specs=[row_spec, _const_spec((D, 3 * D)), _const_spec((1, 3 * D))],
        out_specs=[row_spec, row_spec, row_spec],
        out_shape=[jax.ShapeDtypeStruct((rows, D), _BF16)] * 3,
        compiler_params=pltpu.CompilerParams(
            dimension_semantics=("parallel",), vmem_limit_bytes=vmem_limit),
        cost_estimate=qkv_cost,
    )(x2, prepped["w_qkv"], prepped["b_qkv"])

    # glue: raw row-major view -> (B, H, S, d_k), exactly like torch's .view
    # (contiguous reshape of a bf16 HBM array == free bitcast at the XLA level).
    qh = q.reshape(B, H, S, d_k)
    kh = k.reshape(B, H, S, d_k)
    vh = v.reshape(B, H, S, d_k)

    # --- attention: one (batch, head) tile per grid step ----------------------
    head_spec = pl.BlockSpec((pl.Squeezed(), pl.Squeezed(), S, d_k),
                             lambda b, h: (b, h, 0, 0))
    attn_cost = pl.CostEstimate(
        flops=int(4 * B * H * S * S * d_k),
        transcendentals=int(B * H * S * S),
        bytes_accessed=int(4 * B * S * D * 2))
    ah = pl.pallas_call(
        _attn_kernel,
        grid=(B, H),
        in_specs=[head_spec, head_spec, head_spec],
        out_specs=head_spec,
        out_shape=jax.ShapeDtypeStruct((B, H, S, d_k), _BF16),
        compiler_params=pltpu.CompilerParams(
            dimension_semantics=("parallel", "parallel"),
            vmem_limit_bytes=vmem_limit),
        cost_estimate=attn_cost,
    )(qh, kh, vh)

    # glue: merge heads back = torch's .contiguous().view(B, S, D), flattened to rows
    a2 = ah.reshape(rows, D)

    # --- o_proj + residual + LN + FFN(GELU) + residual + LN (row-tiled) -------
    post_cost = pl.CostEstimate(
        flops=int(2 * rows * (D * D + 2 * D * dff)),
        transcendentals=int(rows * dff),
        bytes_accessed=int(rows * D * (4 + 2 + 4) + (D * D + 2 * D * dff) * 2))
    out2 = pl.pallas_call(
        _post_kernel,
        grid=(rows // tm,),
        in_specs=[row_spec, row_spec,
                  _const_spec((D, D)), _const_spec((1, D)),
                  _const_spec((1, D)), _const_spec((1, D)),
                  _const_spec((D, dff)), _const_spec((1, dff)),
                  _const_spec((dff, D)), _const_spec((1, D))],
        out_specs=row_spec,
        out_shape=jax.ShapeDtypeStruct((rows, D), _F32),
        compiler_params=pltpu.CompilerParams(
            dimension_semantics=("parallel",), vmem_limit_bytes=vmem_limit),
        cost_estimate=post_cost,
    )(x2, a2,
      prepped["wo"], prepped["bo"], prepped["ln_w"], prepped["ln_b"],
      prepped["w1"], prepped["b1"], prepped["w2"], prepped["b2"])
    return out2.reshape(B, S, D)


# ---------------------------------------------------------------------------
# Deterministic parameter init + pure-JAX reference for sanity checking
# ---------------------------------------------------------------------------
def make_params(key, d_model):
    dff = 4 * d_model

    def lin(k, fin, fout):
        kw, kb = jax.random.split(k)
        w = jax.random.normal(kw, (fin, fout), jnp.float32) / jnp.sqrt(fin)
        b = jax.random.normal(kb, (1, fout), jnp.float32) * 0.01
        return w, b

    ks = jax.random.split(key, 6)
    wq, bq = lin(ks[0], d_model, d_model)
    wk, bk = lin(ks[1], d_model, d_model)
    wv, bv = lin(ks[2], d_model, d_model)
    wo, bo = lin(ks[3], d_model, d_model)
    w1, b1 = lin(ks[4], d_model, dff)
    w2, b2 = lin(ks[5], dff, d_model)
    return dict(wq=wq, bq=bq, wk=wk, bk=bk, wv=wv, bv=bv, wo=wo, bo=bo,
                w1=w1, b1=b1, w2=w2, b2=b2,
                ln_w=jnp.ones((1, d_model), jnp.float32),
                ln_b=jnp.zeros((1, d_model), jnp.float32))


def reference(x, params, num_heads):
    B, S, D = x.shape
    d_k = D // num_heads
    q = x @ params["wq"] + params["bq"]
    k = x @ params["wk"] + params["bk"]
    v = x @ params["wv"] + params["bv"]
    qh = q.reshape(B, num_heads, S, d_k)
    kh = k.reshape(B, num_heads, S, d_k)
    vh = v.reshape(B, num_heads, S, d_k)
    s = jnp.einsum("bhqd,bhkd->bhqk", qh, kh) / math.sqrt(d_k)
    p = jax.nn.softmax(s, axis=-1)
    a = jnp.einsum("bhqk,bhkd->bhqd", p, vh).reshape(B, S, D)
    o = a @ params["wo"] + params["bo"]

    def ln(h):
        mu = h.mean(-1, keepdims=True)
        var = ((h - mu) ** 2).mean(-1, keepdims=True)
        return (h - mu) / jnp.sqrt(var + 1e-5) * params["ln_w"] + params["ln_b"]

    h1 = ln(x + o)
    f = h1 @ params["w1"] + params["b1"]
    f = 0.5 * f * (1.0 + jax.lax.erf(f / math.sqrt(2.0)))
    f = f @ params["w2"] + params["b2"]
    return ln(h1 + f)


# ---------------------------------------------------------------------------
if __name__ == "__main__":
    B, S, D, H = 2, 8, 32, 4
    key = jax.random.PRNGKey(0)
    kx, kp = jax.random.split(key)
    x = jax.random.normal(kx, (B, S, D), jnp.float32)
    params = make_params(kp, D)
    prepped = prepare_params(params, H)          # one-time prep, outside jit

    out = transformer_encode_block(x, prepped, num_heads=H)
    out = jax.block_until_ready(out)

    ref = reference(x, params, H)
    assert out.shape == (B, S, D)
    assert jnp.all(jnp.isfinite(out))
    # bf16 MXU operands (per perf review) -> slightly looser than pure-f32 tolerance.
    assert jnp.allclose(out, ref, atol=2e-2, rtol=2e-2), \
        float(jnp.max(jnp.abs(out - ref)))
    print("KERNEL_OK")
</pallas_src>

<mosaic_0001>
module attributes {stable_mosaic.version = 11 : i64} {
  func.func @_attn_kernel(%arg0: i32, %arg1: i32, %arg2: memref<1x1x8x8xbf16, #tpu.memory_space<vmem>>, %arg3: memref<1x1x8x8xbf16, #tpu.memory_space<vmem>>, %arg4: memref<1x1x8x8xbf16, #tpu.memory_space<vmem>>, %arg5: memref<1x1x8x8xbf16, #tpu.memory_space<vmem>>) attributes {dimension_semantics = [#tpu.dimension_semantics<parallel>, #tpu.dimension_semantics<parallel>], iteration_bounds = array<i64: 2, 4>, scalar_prefetch = 0 : i64, scratch_operands = 0 : i64, tpu.core_type = #tpu.core_type<tc>, window_params = [{transform_indices = @transform_0, window_bounds = array<i64: 1, 1, 8, 8>}, {transform_indices = @transform_1, window_bounds = array<i64: 1, 1, 8, 8>}, {transform_indices = @transform_2, window_bounds = array<i64: 1, 1, 8, 8>}, {transform_indices = @transform_3, window_bounds = array<i64: 1, 1, 8, 8>}]} {
    %c0 = arith.constant 0 : index
    %c0_0 = arith.constant 0 : index
    %c0_1 = arith.constant 0 : index
    %c0_2 = arith.constant 0 : index
    %0 = vector.load %arg2[%c0, %c0_0, %c0_1, %c0_2] : memref<1x1x8x8xbf16, #tpu.memory_space<vmem>>, vector<1x1x8x8xbf16>
    %1 = vector.shape_cast %0 : vector<1x1x8x8xbf16> to vector<8x8xbf16>
    %c0_3 = arith.constant 0 : index
    %c0_4 = arith.constant 0 : index
    %c0_5 = arith.constant 0 : index
    %c0_6 = arith.constant 0 : index
    %2 = vector.load %arg3[%c0_3, %c0_4, %c0_5, %c0_6] : memref<1x1x8x8xbf16, #tpu.memory_space<vmem>>, vector<1x1x8x8xbf16>
    %3 = vector.shape_cast %2 : vector<1x1x8x8xbf16> to vector<8x8xbf16>
    %c0_7 = arith.constant 0 : index
    %c0_8 = arith.constant 0 : index
    %c0_9 = arith.constant 0 : index
    %c0_10 = arith.constant 0 : index
    %4 = vector.load %arg4[%c0_7, %c0_8, %c0_9, %c0_10] : memref<1x1x8x8xbf16, #tpu.memory_space<vmem>>, vector<1x1x8x8xbf16>
    %5 = vector.shape_cast %4 : vector<1x1x8x8xbf16> to vector<8x8xbf16>
    "tpu.trace_start"() <{level = 10 : i32, message = "qd,kd->qk"}> : () -> ()
    %cst = arith.constant dense<0.000000e+00> : vector<8x8xf32>
    %6 = tpu.matmul %1, %3, %cst {dimension_numbers = #tpu.dot_dimension_numbers<[1], [1], [0], [0], [0, 0, 1, 0], [], []>} : vector<8x8xbf16>, vector<8x8xbf16>, vector<8x8xf32> -> vector<8x8xf32>
    "tpu.trace_stop"() : () -> ()
    %cst_11 = arith.constant dense<0xFF800000> : vector<8xf32>
    %7 = vector.multi_reduction <maximumf>, %6, %cst_11 [1] : vector<8x8xf32> to vector<8xf32>
    %8 = vector.shape_cast %7 : vector<8xf32> to vector<8x1xf32>
    %9 = vector.broadcast %8 : vector<8x1xf32> to vector<8x8xf32>
    %10 = arith.subf %6, %9 : vector<8x8xf32>
    %11 = math.exp %10 : vector<8x8xf32>
    %cst_12 = arith.constant dense<0.000000e+00> : vector<8xf32>
    %12 = vector.multi_reduction <add>, %11, %cst_12 [1] : vector<8x8xf32> to vector<8xf32>
    %13 = vector.shape_cast %12 : vector<8xf32> to vector<8x1xf32>
    %14 = arith.truncf %11 : vector<8x8xf32> to vector<8x8xbf16>
    %cst_13 = arith.constant dense<0.000000e+00> : vector<8x8xf32>
    %15 = tpu.matmul %14, %5, %cst_13 {dimension_numbers = #tpu.dot_dimension_numbers<[1], [0], [0], [1], [0, 0, 1, 1], [], []>} : vector<8x8xbf16>, vector<8x8xbf16>, vector<8x8xf32> -> vector<8x8xf32>
    %16 = tpu.reciprocal %13 {approx = true} : vector<8x1xf32> -> vector<8x1xf32>
    %17 = vector.broadcast %16 : vector<8x1xf32> to vector<8x8xf32>
    %18 = arith.mulf %15, %17 : vector<8x8xf32>
    %19 = arith.truncf %18 : vector<8x8xf32> to vector<8x8xbf16>
    %c0_14 = arith.constant 0 : index
    %c0_15 = arith.constant 0 : index
    %c0_16 = arith.constant 0 : index
    %c0_17 = arith.constant 0 : index
    %20 = vector.load %arg5[%c0_14, %c0_15, %c0_16, %c0_17] : memref<1x1x8x8xbf16, #tpu.memory_space<vmem>>, vector<1x1x8x8xbf16>
    %21 = vector.shape_cast %20 : vector<1x1x8x8xbf16> to vector<8x8xbf16>
    %22 = vector.shape_cast %19 : vector<8x8xbf16> to vector<1x1x8x8xbf16>
    tpu.vector_store %arg5[%c0_14, %c0_15, %c0_16, %c0_17], %22 {strides = array<i32>} : memref<1x1x8x8xbf16, #tpu.memory_space<vmem>>, vector<1x1x8x8xbf16>,
    return
  }
  func.func @transform_0(%arg0: i32, %arg1: i32) -> (i32, i32, i32, i32) {
    %c0_i32 = arith.constant 0 : i32
    %c0_i32_0 = arith.constant 0 : i32
    %c0_i32_1 = arith.constant 0 : i32
    return %arg0, %arg1, %c0_i32, %c0_i32_0 : i32, i32, i32, i32
  }
  func.func @transform_1(%arg0: i32, %arg1: i32) -> (i32, i32, i32, i32) {
    %c0_i32 = arith.constant 0 : i32
    %c0_i32_0 = arith.constant 0 : i32
    %c0_i32_1 = arith.constant 0 : i32
    return %arg0, %arg1, %c0_i32, %c0_i32_0 : i32, i32, i32, i32
  }
  func.func @transform_2(%arg0: i32, %arg1: i32) -> (i32, i32, i32, i32) {
    %c0_i32 = arith.constant 0 : i32
    %c0_i32_0 = arith.constant 0 : i32
    %c0_i32_1 = arith.constant 0 : i32
    return %arg0, %arg1, %c0_i32, %c0_i32_0 : i32, i32, i32, i32
  }
  func.func @transform_3(%arg0: i32, %arg1: i32) -> (i32, i32, i32, i32) {
    %c0_i32 = arith.constant 0 : i32
    %c0_i32_0 = arith.constant 0 : i32
    %c0_i32_1 = arith.constant 0 : i32
    return %arg0, %arg1, %c0_i32, %c0_i32_0 : i32, i32, i32, i32
  }
}

module attributes {stable_mosaic.version = 11 : i64} {
  func.func @_qkv_kernel(%arg0: i32, %arg1: memref<8x32xf32, #tpu.memory_space<vmem>>, %arg2: memref<32x96xbf16, #tpu.memory_space<vmem>>, %arg3: memref<1x96xf32, #tpu.memory_space<vmem>>, %arg4: memref<8x32xbf16, #tpu.memory_space<vmem>>, %arg5: memref<8x32xbf16, #tpu.memory_space<vmem>>, %arg6: memref<8x32xbf16, #tpu.memory_space<vmem>>) attributes {dimension_semantics = [#tpu.dimension_semantics<parallel>], iteration_bounds = array<i64: 2>, scalar_prefetch = 0 : i64, scratch_operands = 0 : i64, tpu.core_type = #tpu.core_type<tc>, window_params = [{transform_indices = @transform_0, window_bounds = array<i64: 8, 32>}, {pipeline_mode = #tpu.pipeline_mode<synchronous>, transform_indices = @transform_1, window_bounds = array<i64: 32, 96>}, {pipeline_mode = #tpu.pipeline_mode<synchronous>, transform_indices = @transform_2, window_bounds = array<i64: 1, 96>}, {transform_indices = @transform_3, window_bounds = array<i64: 8, 32>}, {transform_indices = @transform_4, window_bounds = array<i64: 8, 32>}, {transform_indices = @transform_5, window_bounds = array<i64: 8, 32>}]} {
    %c0 = arith.constant 0 : index
    %c0_0 = arith.constant 0 : index
    %0 = vector.load %arg1[%c0, %c0_0] : memref<8x32xf32, #tpu.memory_space<vmem>>, vector<8x32xf32>
    %1 = arith.truncf %0 : vector<8x32xf32> to vector<8x32xbf16>
    %c0_1 = arith.constant 0 : index
    %c0_2 = arith.constant 0 : index
    %2 = vector.load %arg2[%c0_1, %c0_2] : memref<32x96xbf16, #tpu.memory_space<vmem>>, vector<32x96xbf16>
    %cst = arith.constant dense<0.000000e+00> : vector<8x96xf32>
    %3 = tpu.matmul %1, %2, %cst {dimension_numbers = #tpu.dot_dimension_numbers<[1], [0], [0], [1], [0, 0, 1, 1], [], []>} : vector<8x32xbf16>, vector<32x96xbf16>, vector<8x96xf32> -> vector<8x96xf32>
    %c0_3 = arith.constant 0 : index
    %c0_4 = arith.constant 0 : index
    %4 = vector.load %arg3[%c0_3, %c0_4] : memref<1x96xf32, #tpu.memory_space<vmem>>, vector<1x96xf32>
    %5 = vector.broadcast %4 : vector<1x96xf32> to vector<8x96xf32>
    %6 = arith.addf %3, %5 : vector<8x96xf32>
    %7 = vector.extract_strided_slice %6 {offsets = [0, 0], sizes = [8, 32], strides = [1, 1]} : vector<8x96xf32> to vector<8x32xf32>
    %8 = arith.truncf %7 : vector<8x32xf32> to vector<8x32xbf16>
    %c0_5 = arith.constant 0 : index
    %c0_6 = arith.constant 0 : index
    %9 = vector.load %arg4[%c0_5, %c0_6] : memref<8x32xbf16, #tpu.memory_space<vmem>>, vector<8x32xbf16>
    tpu.vector_store %arg4[%c0_5, %c0_6], %8 {strides = array<i32>} : memref<8x32xbf16, #tpu.memory_space<vmem>>, vector<8x32xbf16>,
    %10 = vector.extract_strided_slice %6 {offsets = [0, 32], sizes = [8, 32], strides = [1, 1]} : vector<8x96xf32> to vector<8x32xf32>
    %11 = arith.truncf %10 : vector<8x32xf32> to vector<8x32xbf16>
    %c0_7 = arith.constant 0 : index
    %c0_8 = arith.constant 0 : index
    %12 = vector.load %arg5[%c0_7, %c0_8] : memref<8x32xbf16, #tpu.memory_space<vmem>>, vector<8x32xbf16>
    tpu.vector_store %arg5[%c0_7, %c0_8], %11 {strides = array<i32>} : memref<8x32xbf16, #tpu.memory_space<vmem>>, vector<8x32xbf16>,
    %13 = vector.extract_strided_slice %6 {offsets = [0, 64], sizes = [8, 32], strides = [1, 1]} : vector<8x96xf32> to vector<8x32xf32>
    %14 = arith.truncf %13 : vector<8x32xf32> to vector<8x32xbf16>
    %c0_9 = arith.constant 0 : index
    %c0_10 = arith.constant 0 : index
    %15 = vector.load %arg6[%c0_9, %c0_10] : memref<8x32xbf16, #tpu.memory_space<vmem>>, vector<8x32xbf16>
    tpu.vector_store %arg6[%c0_9, %c0_10], %14 {strides = array<i32>} : memref<8x32xbf16, #tpu.memory_space<vmem>>, vector<8x32xbf16>,
    return
  }
  func.func @transform_0(%arg0: i32) -> (i32, i32) {
    %c0_i32 = arith.constant 0 : i32
    %c0_i32_0 = arith.constant 0 : i32
    return %arg0, %c0_i32 : i32, i32
  }
  func.func @transform_1(%arg0: i32) -> (i32, i32) {
    %c0_i32 = arith.constant 0 : i32
    %c0_i32_0 = arith.constant 0 : i32
    %c0_i32_1 = arith.constant 0 : i32
    return %c0_i32, %c0_i32_0 : i32, i32
  }
  func.func @transform_2(%arg0: i32) -> (i32, i32) {
    %c0_i32 = arith.constant 0 : i32
    %c0_i32_0 = arith.constant 0 : i32
    %c0_i32_1 = arith.constant 0 : i32
    return %c0_i32, %c0_i32_0 : i32, i32
  }
  func.func @transform_3(%arg0: i32) -> (i32, i32) {
    %c0_i32 = arith.constant 0 : i32
    %c0_i32_0 = arith.constant 0 : i32
    return %arg0, %c0_i32 : i32, i32
  }
  func.func @transform_4(%arg0: i32) -> (i32, i32) {
    %c0_i32 = arith.constant 0 : i32
    %c0_i32_0 = arith.constant 0 : i32
    return %arg0, %c0_i32 : i32, i32
  }
  func.func @transform_5(%arg0: i32) -> (i32, i32) {
    %c0_i32 = arith.constant 0 : i32
    %c0_i32_0 = arith.constant 0 : i32
    return %arg0, %c0_i32 : i32, i32
  }
}

module attributes {stable_mosaic.version = 11 : i64} {
  func.func @_post_kernel(%arg0: i32, %arg1: memref<8x32xf32, #tpu.memory_space<vmem>>, %arg2: memref<8x32xbf16, #tpu.memory_space<vmem>>, %arg3: memref<32x32xbf16, #tpu.memory_space<vmem>>, %arg4: memref<1x32xf32, #tpu.memory_space<vmem>>, %arg5: memref<1x32xf32, #tpu.memory_space<vmem>>, %arg6: memref<1x32xf32, #tpu.memory_space<vmem>>, %arg7: memref<32x128xbf16, #tpu.memory_space<vmem>>, %arg8: memref<1x128xf32, #tpu.memory_space<vmem>>, %arg9: memref<128x32xbf16, #tpu.memory_space<vmem>>, %arg10: memref<1x32xf32, #tpu.memory_space<vmem>>, %arg11: memref<8x32xf32, #tpu.memory_space<vmem>>) attributes {dimension_semantics = [#tpu.dimension_semantics<parallel>], iteration_bounds = array<i64: 2>, scalar_prefetch = 0 : i64, scratch_operands = 0 : i64, tpu.core_type = #tpu.core_type<tc>, window_params = [{transform_indices = @transform_0, window_bounds = array<i64: 8, 32>}, {transform_indices = @transform_1, window_bounds = array<i64: 8, 32>}, {pipeline_mode = #tpu.pipeline_mode<synchronous>, transform_indices = @transform_2, window_bounds = array<i64: 32, 32>}, {pipeline_mode = #tpu.pipeline_mode<synchronous>, transform_indices = @transform_3, window_bounds = array<i64: 1, 32>}, {pipeline_mode = #tpu.pipeline_mode<synchronous>, transform_indices = @transform_4, window_bounds = array<i64: 1, 32>}, {pipeline_mode = #tpu.pipeline_mode<synchronous>, transform_indices = @transform_5, window_bounds = array<i64: 1, 32>}, {pipeline_mode = #tpu.pipeline_mode<synchronous>, transform_indices = @transform_6, window_bounds = array<i64: 32, 128>}, {pipeline_mode = #tpu.pipeline_mode<synchronous>, transform_indices = @transform_7, window_bounds = array<i64: 1, 128>}, {pipeline_mode = #tpu.pipeline_mode<synchronous>, transform_indices = @transform_8, window_bounds = array<i64: 128, 32>}, {pipeline_mode = #tpu.pipeline_mode<synchronous>, transform_indices = @transform_9, window_bounds = array<i64: 1, 32>}, {transform_indices = @transform_10, window_bounds = array<i64: 8, 32>}]} {
    %c0 = arith.constant 0 : index
    %c0_0 = arith.constant 0 : index
    %0 = vector.load %arg5[%c0, %c0_0] : memref<1x32xf32, #tpu.memory_space<vmem>>, vector<1x32xf32>
    %c0_1 = arith.constant 0 : index
    %c0_2 = arith.constant 0 : index
    %1 = vector.load %arg6[%c0_1, %c0_2] : memref<1x32xf32, #tpu.memory_space<vmem>>, vector<1x32xf32>
    %c0_3 = arith.constant 0 : index
    %c0_4 = arith.constant 0 : index
    %2 = vector.load %arg1[%c0_3, %c0_4] : memref<8x32xf32, #tpu.memory_space<vmem>>, vector<8x32xf32>
    %c0_5 = arith.constant 0 : index
    %c0_6 = arith.constant 0 : index
    %3 = vector.load %arg2[%c0_5, %c0_6] : memref<8x32xbf16, #tpu.memory_space<vmem>>, vector<8x32xbf16>
    %c0_7 = arith.constant 0 : index
    %c0_8 = arith.constant 0 : index
    %4 = vector.load %arg3[%c0_7, %c0_8] : memref<32x32xbf16, #tpu.memory_space<vmem>>, vector<32x32xbf16>
    %cst = arith.constant dense<0.000000e+00> : vector<8x32xf32>
    %5 = tpu.matmul %3, %4, %cst {dimension_numbers = #tpu.dot_dimension_numbers<[1], [0], [0], [1], [0, 0, 1, 1], [], []>} : vector<8x32xbf16>, vector<32x32xbf16>, vector<8x32xf32> -> vector<8x32xf32>
    %c0_9 = arith.constant 0 : index
    %c0_10 = arith.constant 0 : index
    %6 = vector.load %arg4[%c0_9, %c0_10] : memref<1x32xf32, #tpu.memory_space<vmem>>, vector<1x32xf32>
    %7 = vector.broadcast %6 : vector<1x32xf32> to vector<8x32xf32>
    %8 = arith.addf %5, %7 : vector<8x32xf32>
    %9 = arith.addf %2, %8 : vector<8x32xf32>
    %cst_11 = arith.constant dense<0.000000e+00> : vector<8xf32>
    %10 = vector.multi_reduction <add>, %9, %cst_11 [1] : vector<8x32xf32> to vector<8xf32>
    %11 = vector.shape_cast %10 : vector<8xf32> to vector<8x1xf32>
    %cst_12 = arith.constant 3.200000e+01 : f32
    %12 = vector.broadcast %cst_12 : f32 to vector<8x1xf32>
    %13 = arith.divf %11, %12 : vector<8x1xf32>
    %14 = vector.broadcast %13 : vector<8x1xf32> to vector<8x32xf32>
    %15 = arith.subf %9, %14 : vector<8x32xf32>
    %16 = arith.mulf %15, %15 : vector<8x32xf32>
    %cst_13 = arith.constant dense<0.000000e+00> : vector<8xf32>
    %17 = vector.multi_reduction <add>, %16, %cst_13 [1] : vector<8x32xf32> to vector<8xf32>
    %18 = vector.shape_cast %17 : vector<8xf32> to vector<8x1xf32>
    %cst_14 = arith.constant 3.200000e+01 : f32
    %19 = vector.broadcast %cst_14 : f32 to vector<8x1xf32>
    %20 = arith.divf %18, %19 : vector<8x1xf32>
    %21 = vector.broadcast %13 : vector<8x1xf32> to vector<8x32xf32>
    %22 = arith.subf %9, %21 : vector<8x32xf32>
    %cst_15 = arith.constant 9.99999974E-6 : f32
    %23 = vector.broadcast %cst_15 : f32 to vector<8x1xf32>
    %24 = arith.addf %20, %23 : vector<8x1xf32>
    %25 = math.rsqrt %24 : vector<8x1xf32>
    %26 = vector.broadcast %25 : vector<8x1xf32> to vector<8x32xf32>
    %27 = arith.mulf %22, %26 : vector<8x32xf32>
    %28 = vector.broadcast %0 : vector<1x32xf32> to vector<8x32xf32>
    %29 = arith.mulf %27, %28 : vector<8x32xf32>
    %30 = vector.broadcast %1 : vector<1x32xf32> to vector<8x32xf32>
    %31 = arith.addf %29, %30 : vector<8x32xf32>
    %32 = arith.truncf %31 : vector<8x32xf32> to vector<8x32xbf16>
    %c0_16 = arith.constant 0 : index
    %c0_17 = arith.constant 0 : index
    %33 = vector.load %arg7[%c0_16, %c0_17] : memref<32x128xbf16, #tpu.memory_space<vmem>>, vector<32x128xbf16>
    %cst_18 = arith.constant dense<0.000000e+00> : vector<8x128xf32>
    %34 = tpu.matmul %32, %33, %cst_18 {dimension_numbers = #tpu.dot_dimension_numbers<[1], [0], [0], [1], [0, 0, 1, 1], [], []>} : vector<8x32xbf16>, vector<32x128xbf16>, vector<8x128xf32> -> vector<8x128xf32>
    %c0_19 = arith.constant 0 : index
    %c0_20 = arith.constant 0 : index
    %35 = vector.load %arg8[%c0_19, %c0_20] : memref<1x128xf32, #tpu.memory_space<vmem>>, vector<1x128xf32>
    %36 = vector.broadcast %35 : vector<1x128xf32> to vector<8x128xf32>
    %37 = arith.addf %34, %36 : vector<8x128xf32>
    %cst_21 = arith.constant 5.000000e-01 : f32
    %38 = vector.broadcast %cst_21 : f32 to vector<8x128xf32>
    %39 = arith.mulf %38, %37 : vector<8x128xf32>
    %cst_22 = arith.constant 0.707106769 : f32
    %40 = vector.broadcast %cst_22 : f32 to vector<8x128xf32>
    %41 = arith.mulf %37, %40 : vector<8x128xf32>
    %42 = math.erf %41 : vector<8x128xf32>
    %cst_23 = arith.constant 1.000000e+00 : f32
    %43 = vector.broadcast %cst_23 : f32 to vector<8x128xf32>
    %44 = arith.addf %43, %42 : vector<8x128xf32>
    %45 = arith.mulf %39, %44 : vector<8x128xf32>
    %46 = arith.truncf %45 : vector<8x128xf32> to vector<8x128xbf16>
    %c0_24 = arith.constant 0 : index
    %c0_25 = arith.constant 0 : index
    %47 = vector.load %arg9[%c0_24, %c0_25] : memref<128x32xbf16, #tpu.memory_space<vmem>>, vector<128x32xbf16>
    %cst_26 = arith.constant dense<0.000000e+00> : vector<8x32xf32>
    %48 = tpu.matmul %46, %47, %cst_26 {dimension_numbers = #tpu.dot_dimension_numbers<[1], [0], [0], [1], [0, 0, 1, 1], [], []>} : vector<8x128xbf16>, vector<128x32xbf16>, vector<8x32xf32> -> vector<8x32xf32>
    %c0_27 = arith.constant 0 : index
    %c0_28 = arith.constant 0 : index
    %49 = vector.load %arg10[%c0_27, %c0_28] : memref<1x32xf32, #tpu.memory_space<vmem>>, vector<1x32xf32>
    %50 = vector.broadcast %49 : vector<1x32xf32> to vector<8x32xf32>
    %51 = arith.addf %48, %50 : vector<8x32xf32>
    %52 = arith.addf %31, %51 : vector<8x32xf32>
    %cst_29 = arith.constant dense<0.000000e+00> : vector<8xf32>
    %53 = vector.multi_reduction <add>, %52, %cst_29 [1] : vector<8x32xf32> to vector<8xf32>
    %54 = vector.shape_cast %53 : vector<8xf32> to vector<8x1xf32>
    %cst_30 = arith.constant 3.200000e+01 : f32
    %55 = vector.broadcast %cst_30 : f32 to vector<8x1xf32>
    %56 = arith.divf %54, %55 : vector<8x1xf32>
    %57 = vector.broadcast %56 : vector<8x1xf32> to vector<8x32xf32>
    %58 = arith.subf %52, %57 : vector<8x32xf32>
    %59 = arith.mulf %58, %58 : vector<8x32xf32>
    %cst_31 = arith.constant dense<0.000000e+00> : vector<8xf32>
    %60 = vector.multi_reduction <add>, %59, %cst_31 [1] : vector<8x32xf32> to vector<8xf32>
    %61 = vector.shape_cast %60 : vector<8xf32> to vector<8x1xf32>
    %cst_32 = arith.constant 3.200000e+01 : f32
    %62 = vector.broadcast %cst_32 : f32 to vector<8x1xf32>
    %63 = arith.divf %61, %62 : vector<8x1xf32>
    %64 = vector.broadcast %56 : vector<8x1xf32> to vector<8x32xf32>
    %65 = arith.subf %52, %64 : vector<8x32xf32>
    %cst_33 = arith.constant 9.99999974E-6 : f32
    %66 = vector.broadcast %cst_33 : f32 to vector<8x1xf32>
    %67 = arith.addf %63, %66 : vector<8x1xf32>
    %68 = math.rsqrt %67 : vector<8x1xf32>
    %69 = vector.broadcast %68 : vector<8x1xf32> to vector<8x32xf32>
    %70 = arith.mulf %65, %69 : vector<8x32xf32>
    %71 = vector.broadcast %0 : vector<1x32xf32> to vector<8x32xf32>
    %72 = arith.mulf %70, %71 : vector<8x32xf32>
    %73 = vector.broadcast %1 : vector<1x32xf32> to vector<8x32xf32>
    %74 = arith.addf %72, %73 : vector<8x32xf32>
    %c0_34 = arith.constant 0 : index
    %c0_35 = arith.constant 0 : index
    %75 = vector.load %arg11[%c0_34, %c0_35] : memref<8x32xf32, #tpu.memory_space<vmem>>, vector<8x32xf32>
    tpu.vector_store %arg11[%c0_34, %c0_35], %74 {strides = array<i32>} : memref<8x32xf32, #tpu.memory_space<vmem>>, vector<8x32xf32>,
    return
  }
  func.func @transform_0(%arg0: i32) -> (i32, i32) {
    %c0_i32 = arith.constant 0 : i32
    %c0_i32_0 = arith.constant 0 : i32
    return %arg0, %c0_i32 : i32, i32
  }
  func.func @transform_1(%arg0: i32) -> (i32, i32) {
    %c0_i32 = arith.constant 0 : i32
    %c0_i32_0 = arith.constant 0 : i32
    return %arg0, %c0_i32 : i32, i32
  }
  func.func @transform_2(%arg0: i32) -> (i32, i32) {
    %c0_i32 = arith.constant 0 : i32
    %c0_i32_0 = arith.constant 0 : i32
    %c0_i32_1 = arith.constant 0 : i32
    return %c0_i32, %c0_i32_0 : i32, i32
  }
  func.func @transform_3(%arg0: i32) -> (i32, i32) {
    %c0_i32 = arith.constant 0 : i32
    %c0_i32_0 = arith.constant 0 : i32
    %c0_i32_1 = arith.constant 0 : i32
    return %c0_i32, %c0_i32_0 : i32, i32
  }
  func.func @transform_4(%arg0: i32) -> (i32, i32) {
    %c0_i32 = arith.constant 0 : i32
    %c0_i32_0 = arith.constant 0 : i32
    %c0_i32_1 = arith.constant 0 : i32
    return %c0_i32, %c0_i32_0 : i32, i32
  }
  func.func @transform_5(%arg0: i32) -> (i32, i32) {
    %c0_i32 = arith.constant 0 : i32
    %c0_i32_0 = arith.constant 0 : i32
    %c0_i32_1 = arith.constant 0 : i32
    return %c0_i32, %c0_i32_0 : i32, i32
  }
  func.func @transform_6(%arg0: i32) -> (i32, i32) {
    %c0_i32 = arith.constant 0 : i32
    %c0_i32_0 = arith.constant 0 : i32
    %c0_i32_1 = arith.constant 0 : i32
    return %c0_i32, %c0_i32_0 : i32, i32
  }
  func.func @transform_7(%arg0: i32) -> (i32, i32) {
    %c0_i32 = arith.constant 0 : i32
    %c0_i32_0 = arith.constant 0 : i32
    %c0_i32_1 = arith.constant 0 : i32
    return %c0_i32, %c0_i32_0 : i32, i32
  }
  func.func @transform_8(%arg0: i32) -> (i32, i32) {
    %c0_i32 = arith.constant 0 : i32
    %c0_i32_0 = arith.constant 0 : i32
    %c0_i32_1 = arith.constant 0 : i32
    return %c0_i32, %c0_i32_0 : i32, i32
  }
  func.func @transform_9(%arg0: i32) -> (i32, i32) {
    %c0_i32 = arith.constant 0 : i32
    %c0_i32_0 = arith.constant 0 : i32
    %c0_i32_1 = arith.constant 0 : i32
    return %c0_i32, %c0_i32_0 : i32, i32
  }
  func.func @transform_10(%arg0: i32) -> (i32, i32) {
    %c0_i32 = arith.constant 0 : i32
    %c0_i32_0 = arith.constant 0 : i32
    return %arg0, %c0_i32 : i32, i32
  }
}

</mosaic_0001>

<llo_original>
// kernel: transformer_encode_block.4
$region0: #{transformer_encode_block.4}
  #allocation0 [shape = 'u32[]', space=smem, size = 0x4, offset = 0x4, fixed_abs, tag = 'smem constant byte address 0x4 - core index']
  #allocation1 [shape = 'u32[144,128]{1,0:T(1,128)}', space=vmem, size = 0x12000, scoped, tag = 'internal scratch']
  %s0 = inlined_call_operand.vmem [shape: bf16[2,4,8,8], index: 0, kind: input, shape index: {}]
  %s1 = inlined_call_operand.vmem [shape: bf16[2,4,8,8], index: 1, kind: input, shape index: {}]
  %s2 = inlined_call_operand.vmem [shape: bf16[2,4,8,8], index: 2, kind: input, shape index: {}]
  %s3 = inlined_call_operand.vmem [shape: bf16[2,4,8,8], index: 3, kind: output, shape index: {}]
  %s4 = sld [smem:[#allocation0]]
  $region45: #{transformer_encode_block.4} parent=0
    _
  %s6 = ssub.s32 1, %s4
  %s7 = scalar_select 0, %s6, %s4
  loop: start=0, step=1, limit=10
  $region2: #{transformer_encode_block.4} parent=0 // loop_pre_header
    _
  $region3: #{transformer_encode_block.4} parent=0 // loop_header
    %s9 = sphi 0, %s13
    %p10 = scmp.ge.s32.totalorder %s9, 10
    %s16 = sphi 0, %s28
    %s17 = sphi 0, %s24
    %s18 = sphi 0, %s16
    %s19 = sphi 0, %s17
    %s20 = sphi 0, %s18
    %s21 = sphi 0, %s19
    %s33 = sphi 0, %s35
    %s36 = sphi 0, %s33
    %s37 = sphi 0, %s36
    %s53 = sphi 0, %s37
    %s61 = sphi 0, %s63
    %s64 = sphi 0, %s61
    %s65 = sphi 0, %s64
    %s81 = sphi 0, %s65
    %s89 = sphi 0, %s91
    %s92 = sphi 0, %s89
    %s93 = sphi 0, %s92
    %s109 = sphi 0, %s93
    %s117 = sphi 0, %s119
    %s120 = sphi 0, %s117
    %s121 = sphi 0, %s120
    %s137 = sphi 0, %s121
  $region4: #{transformer_encode_block.4} parent=0 // loop_header_branch
    %12 = sbr.rel (%p10) target = $region8
  $region5: #{transformer_encode_block.4} parent=0 // loop_body
    %s14 = ssub.s32 %s9, 1
    %s15 = ssub.s32 %s9, 2
    %s22 = sadd.s32 1, %s17
    %p23 = scmp.ge.s32.totalorder %s22, 4
    %s24 = scalar_select %p23, 0, %s22
    %s25 = sadd.s32 1, %s16
    %s26 = scalar_select %p23, %s25, %s16
    %p27 = scmp.ge.s32.totalorder %s26, 2
    %s28 = scalar_select %p27, 0, %s26
    %s29 = ssub.s32 %s16, %s28
    %s30 = ssub.s32 %s17, %s24
    %s31 = sor.u32 %s29, %s30
    %p32 = scmp.eq.s32.totalorder %s31, 0
    %s34 = sadd.s32 %s33, 1
    %s35 = scalar_select %p32, %s33, %s34
    %p38 = pneg %p32
    %p39 = scmp.eq.s32.totalorder %s9, 7
    %p40 = por %p38, %p39
    %p41 = scmp.ne.s32.totalorder %s33, %s36
    %p42 = scmp.eq.s32.totalorder %s9, 0
    %p43 = por %p41, %p42
    %p44 = scmp.ne.s32.totalorder %s33, %s36
    %p45 = scmp.eq.s32.totalorder %s14, 7
    %p46 = por %p44, %p45
    %p47 = scmp.ne.s32.totalorder %s36, %s37
    %p48 = scmp.eq.s32.totalorder %s14, 0
    %p49 = por %p47, %p48
    %p50 = scmp.ne.s32.totalorder %s36, %s37
    %p51 = scmp.eq.s32.totalorder %s15, 7
    %p52 = por %p50, %p51
    %p54 = scmp.ne.s32.totalorder %s37, %s53
    %p55 = scmp.eq.s32.totalorder %s15, 0
    %p56 = por %p54, %p55
    %s57 = ssub.s32 %s16, %s28
    %s58 = ssub.s32 %s17, %s24
    %s59 = sor.u32 %s57, %s58
    %p60 = scmp.eq.s32.totalorder %s59, 0
    %s62 = sadd.s32 %s61, 1
    %s63 = scalar_select %p60, %s61, %s62
    %p66 = pneg %p60
    %p67 = scmp.eq.s32.totalorder %s9, 7
    %p68 = por %p66, %p67
    %p69 = scmp.ne.s32.totalorder %s61, %s64
    %p70 = scmp.eq.s32.totalorder %s9, 0
    %p71 = por %p69, %p70
    %p72 = scmp.ne.s32.totalorder %s61, %s64
    %p73 = scmp.eq.s32.totalorder %s14, 7
    %p74 = por %p72, %p73
    %p75 = scmp.ne.s32.totalorder %s64, %s65
    %p76 = scmp.eq.s32.totalorder %s14, 0
    %p77 = por %p75, %p76
    %p78 = scmp.ne.s32.totalorder %s64, %s65
    %p79 = scmp.eq.s32.totalorder %s15, 7
    %p80 = por %p78, %p79
    %p82 = scmp.ne.s32.totalorder %s65, %s81
    %p83 = scmp.eq.s32.totalorder %s15, 0
    %p84 = por %p82, %p83
    %s85 = ssub.s32 %s16, %s28
    %s86 = ssub.s32 %s17, %s24
    %s87 = sor.u32 %s85, %s86
    %p88 = scmp.eq.s32.totalorder %s87, 0
    %s90 = sadd.s32 %s89, 1
    %s91 = scalar_select %p88, %s89, %s90
    %p94 = pneg %p88
    %p95 = scmp.eq.s32.totalorder %s9, 7
    %p96 = por %p94, %p95
    %p97 = scmp.ne.s32.totalorder %s89, %s92
    %p98 = scmp.eq.s32.totalorder %s9, 0
    %p99 = por %p97, %p98
    %p100 = scmp.ne.s32.totalorder %s89, %s92
    %p101 = scmp.eq.s32.totalorder %s14, 7
    %p102 = por %p100, %p101
    %p103 = scmp.ne.s32.totalorder %s92, %s93
    %p104 = scmp.eq.s32.totalorder %s14, 0
    %p105 = por %p103, %p104
    %p106 = scmp.ne.s32.totalorder %s92, %s93
    %p107 = scmp.eq.s32.totalorder %s15, 7
    %p108 = por %p106, %p107
    %p110 = scmp.ne.s32.totalorder %s93, %s109
    %p111 = scmp.eq.s32.totalorder %s15, 0
    %p112 = por %p110, %p111
    %s113 = ssub.s32 %s16, %s28
    %s114 = ssub.s32 %s17, %s24
    %s115 = sor.u32 %s113, %s114
    %p116 = scmp.eq.s32.totalorder %s115, 0
    %s118 = sadd.s32 %s117, 1
    %s119 = scalar_select %p116, %s117, %s118
    %p122 = pneg %p116
    %p123 = scmp.eq.s32.totalorder %s9, 7
    %p124 = por %p122, %p123
    %p125 = scmp.ne.s32.totalorder %s117, %s120
    %p126 = scmp.eq.s32.totalorder %s9, 0
    %p127 = por %p125, %p126
    %p128 = scmp.ne.s32.totalorder %s117, %s120
    %p129 = scmp.eq.s32.totalorder %s14, 7
    %p130 = por %p128, %p129
    %p131 = scmp.ne.s32.totalorder %s120, %s121
    %p132 = scmp.eq.s32.totalorder %s14, 0
    %p133 = por %p131, %p132
    %p134 = scmp.ne.s32.totalorder %s120, %s121
    %p135 = scmp.eq.s32.totalorder %s15, 7
    %p136 = por %p134, %p135
    %p138 = scmp.ne.s32.totalorder %s121, %s137
    %p139 = scmp.eq.s32.totalorder %s15, 0
    %p140 = por %p138, %p139
    %p141 = scmp.le.s32.totalorder 1, %s9
    %p142 = scmp.lt.s32.totalorder %s9, 9
    %p143 = pnand %p141, %p142
    %p144 = pneg %p143
    // Predicated region
    $region9: #{transformer_encode_block.4} parent=5 // pred_check
      _
    $region10: #{transformer_encode_block.4} parent=5 // pred_check_branch
      %146 = sbr.rel (%p143) target = $region12
    $region11: #{transformer_encode_block.4} parent=5 // pred_region
      %s147 = ssub.s32 %s9, 1
    $region12: #{transformer_encode_block.4} parent=5 // pred_fallthru
      _
    %p148 = scmp.lt.s32.totalorder %s9, 8
    // Predicated region
    $region13: #{transformer_encode_block.4} parent=5 // pred_check
      %p149 = pneg %p148
    $region14: #{transformer_encode_block.4} parent=5 // pred_check_branch
      %151 = sbr.rel (%p149) target = $region16
    $region15: #{transformer_encode_block.4} parent=5 // pred_region
      // Predicated region
      $region17: #{transformer_encode_block.4} parent=15 // pred_check
        %p152 = pneg %p43
      $region18: #{transformer_encode_block.4} parent=15 // pred_check_branch
        %154 = sbr.rel (%p152) target = $region20
      $region19: #{transformer_encode_block.4} parent=15 // pred_region
        %p155 = scmp.lt.s32.totalorder %s16, 1
        %s156 = scalar_select %p155, %s16, 1
        %p157 = scmp.lt.s32.totalorder %s17, 3
        %s158 = scalar_select %p157, %s17, 3
        %s159 = smul.addr %s156, 4
        %s160 = sadd.s32 %s158, %s159
        %s161 = smul.addr %s160, 4
        %s162 = scalar_lea.vmem %s0, %s161
      $region20: #{transformer_encode_block.4} parent=15 // pred_fallthru
        _
      // Predicated region
      $region21: #{transformer_encode_block.4} parent=15 // pred_check
        %p163 = pneg %p71
      $region22: #{transformer_encode_block.4} parent=15 // pred_check_branch
        %165 = sbr.rel (%p163) target = $region24
      $region23: #{transformer_encode_block.4} parent=15 // pred_region
        %p166 = scmp.lt.s32.totalorder %s16, 1
        %s167 = scalar_select %p166, %s16, 1
        %p168 = scmp.lt.s32.totalorder %s17, 3
        %s169 = scalar_select %p168, %s17, 3
        %s170 = smul.addr %s167, 4
        %s171 = sadd.s32 %s169, %s170
        %s172 = smul.addr %s171, 4
        %s173 = scalar_lea.vmem %s1, %s172
      $region24: #{transformer_encode_block.4} parent=15 // pred_fallthru
        _
      // Predicated region
      $region25: #{transformer_encode_block.4} parent=15 // pred_check
        %p174 = pneg %p99
      $region26: #{transformer_encode_block.4} parent=15 // pred_check_branch
        %176 = sbr.rel (%p174) target = $region28
      $region27: #{transformer_encode_block.4} parent=15 // pred_region
        %p177 = scmp.lt.s32.totalorder %s16, 1
        %s178 = scalar_select %p177, %s16, 1
        %p179 = scmp.lt.s32.totalorder %s17, 3
        %s180 = scalar_select %p179, %s17, 3
        %s181 = smul.addr %s178, 4
        %s182 = sadd.s32 %s180, %s181
        %s183 = smul.addr %s182, 4
        %s184 = scalar_lea.vmem %s2, %s183
      $region28: #{transformer_encode_block.4} parent=15 // pred_fallthru
        _
    $region16: #{transformer_encode_block.4} parent=5 // pred_fallthru
      _
    %p185 = scmp.le.s32.totalorder 1, %s9
    %p186 = scmp.lt.s32.totalorder %s9, 9
    %p187 = pnand %p185, %p186
    %p188 = pneg %p187
    // Predicated region
    $region29: #{transformer_encode_block.4} parent=5 // pred_check
      _
    $region30: #{transformer_encode_block.4} parent=5 // pred_check_branch
      %190 = sbr.rel (%p187) target = $region32
    $region31: #{transformer_encode_block.4} parent=5 // pred_region
      %s191 = ssub.s32 %s9, 1
      %p192 = scmp.lt.s32.totalorder %s18, 1
      %s193 = scalar_select %p192, %s18, 1
      %p194 = scmp.lt.s32.totalorder %s19, 3
      %s195 = scalar_select %p194, %s19, 3
      %s196 = smul.addr %s193, 4
      %s197 = sadd.s32 %s195, %s196
      %s198 = smul.addr %s197, 4
      %s199 = scalar_lea.vmem %s0, %s198
      %p200 = pneg %p49
      %p201 = pneg %p46
      %p202 = scmp.lt.s32.totalorder %s18, 1
      %s203 = scalar_select %p202, %s18, 1
      %p204 = scmp.lt.s32.totalorder %s19, 3
      %s205 = scalar_select %p204, %s19, 3
      %s206 = smul.addr %s203, 4
      %s207 = sadd.s32 %s205, %s206
      %s208 = smul.addr %s207, 4
      %s209 = scalar_lea.vmem %s1, %s208
      %p210 = pneg %p77
      %p211 = pneg %p74
      %p212 = scmp.lt.s32.totalorder %s18, 1
      %s213 = scalar_select %p212, %s18, 1
      %p214 = scmp.lt.s32.totalorder %s19, 3
      %s215 = scalar_select %p214, %s19, 3
      %s216 = smul.addr %s213, 4
      %s217 = sadd.s32 %s215, %s216
      %s218 = smul.addr %s217, 4
      %s219 = scalar_lea.vmem %s2, %s218
      %p220 = pneg %p105
      %p221 = pneg %p102
      %p222 = pneg %p133
      %p223 = pneg %p130
      %p224 = scmp.lt.s32.totalorder %s18, 1
      %s225 = scalar_select %p224, %s18, 1
      %p226 = scmp.lt.s32.totalorder %s19, 3
      %s227 = scalar_select %p226, %s19, 3
      %s228 = smul.addr %s225, 4
      %s229 = sadd.s32 %s227, %s228
      %s230 = smul.addr %s229, 4
      %s231 = scalar_lea.vmem %s3, %s230
      %p232 = scmp.lt.s32.totalorder %s18, 1
      %s233 = scalar_select %p232, %s18, 1
      %p234 = scmp.lt.s32.totalorder %s19, 3
      %s235 = scalar_select %p234, %s19, 3
      %s236 = smul.addr %s233, 4
      %s237 = sadd.s32 %s235, %s236
      %s238 = smul.addr %s237, 4
      %s239 = scalar_lea.vmem %s0, %s238
      %p240 = scmp.lt.s32.totalorder %s18, 1
      %s241 = scalar_select %p240, %s18, 1
      %p242 = scmp.lt.s32.totalorder %s19, 3
      %s243 = scalar_select %p242, %s19, 3
      %s244 = smul.addr %s241, 4
      %s245 = sadd.s32 %s243, %s244
      %s246 = smul.addr %s245, 4
      %s247 = scalar_lea.vmem %s1, %s246
      %p248 = scmp.lt.s32.totalorder %s18, 1
      %s249 = scalar_select %p248, %s18, 1
      %p250 = scmp.lt.s32.totalorder %s19, 3
      %s251 = scalar_select %p250, %s19, 3
      %s252 = smul.addr %s249, 4
      %s253 = sadd.s32 %s251, %s252
      %s254 = smul.addr %s253, 4
      %s255 = scalar_lea.vmem %s2, %s254
      %p256 = scmp.lt.s32.totalorder %s18, 1
      %s257 = scalar_select %p256, %s18, 1
      %p258 = scmp.lt.s32.totalorder %s19, 3
      %s259 = scalar_select %p258, %s19, 3
      %s260 = smul.addr %s257, 4
      %s261 = sadd.s32 %s259, %s260
      %s262 = smul.addr %s261, 4
      %s263 = scalar_lea.vmem %s3, %s262
      %v265 = vld [vmem:[%s239] sm:$0xf]
      %v266 = vld [vmem:[%s247] sm:$0xf]
      %v267 = vld [vmem:[%s255] sm:$0xf]
      %vm268 = vcmask 64512
      %v270 = vsel %vm268, %v265, 0
      %v273 = vsel %vm268, %v266, 0
      %275 = vmatprep.subr.bf16.mxu0 0
      %276 = vmatpush1.bf16.xpose.msra.mxu0 %v273
      %277 = vmatprep.subr.bf16.mxu0 0
      %278 = vmatpush1.bf16.xpose.msra.mxu0 0
      %279 = vmatprep.subr.bf16.mxu0 0
      %280 = vmatpush1.bf16.xpose.msra.mxu0 0
      %281 = vmatprep.subr.bf16.mxu0 0
      %282 = vmatpush1.bf16.xpose.msra.mxu0 0
      %283 = vmatprep.subr.bf16.mxu0 0
      %284 = vmatpush1.bf16.xpose.msra.mxu0 0
      %285 = vmatprep.subr.bf16.mxu0 0
      %286 = vmatpush1.bf16.xpose.msra.mxu0 0
      %287 = vmatprep.subr.bf16.mxu0 0
      %288 = vmatpush1.bf16.xpose.msra.mxu0 0
      %289 = vmatprep.subr.bf16.mxu0 0
      %290 = vmatpush1.bf16.xpose.msra.mxu0 0
      %291 = vmatprep.subr.bf16.mxu0 0
      %292 = vmatpush1.bf16.xpose.msra.mxu0 0
      %293 = vmatprep.subr.bf16.mxu0 0
      %294 = vmatpush1.bf16.xpose.msra.mxu0 0
      %295 = vmatprep.subr.bf16.mxu0 0
      %296 = vmatpush1.bf16.xpose.msra.mxu0 0
      %297 = vmatprep.subr.bf16.mxu0 0
      %298 = vmatpush1.bf16.xpose.msra.mxu0 0
      %299 = vmatprep.subr.bf16.mxu0 0
      %300 = vmatpush1.bf16.xpose.msra.mxu0 0
      %301 = vmatprep.subr.bf16.mxu0 0
      %302 = vmatpush1.bf16.xpose.msra.mxu0 0
      %303 = vmatprep.subr.bf16.mxu0 0
      %304 = vmatpush1.bf16.xpose.msra.mxu0 0
      %305 = vmatprep.subr.bf16.mxu0 0
      %306 = vmatpush1.bf16.xpose.msra.mxu0 0
      %307 = vmatprep.mubr.bf16.mxu0 0
      %308 = vmatmul.mubr.bf16.gmra.mrb[0].mxu0 %v270
      %v309 = vpop.f32.mrb[0].mxu0
      %v310 = vadd.f32 0.0, %v309
      %v311 = vpop.f32.mrb[0].mxu0
      %v312 = vpop.f32.mrb[0].mxu0
      %v313 = vpop.f32.mrb[0].mxu0
      %314 = vdwg.mxu0
      %v315 = vsel %vm268, %v310, -inf
      %316 = vmax.xlane.f32.xlu0 %v315
      %v317 = vpop.xlane.xlu0 %316
      %v318 = vsub.f32 %v310, %v317
      %v319 = vmul.f32 %v318, 1.442695
      %v320 = vpow.pop %v319
      %v321 = vsel %vm268, %v320, 0.0
      %322 = vadd.xlane.f32.xlu0 %v321
      %v323 = vpop.xlane.xlu0 %322
      %v324 = vpack.c.bf16 %v320, %v320
      %v326 = vsel %vm268, %v324, 0
      %vm328 = vcmask 1043456
      %v330 = vsel %vm328, %v267, 0
      %332 = vmatprep.subr.bf16.mxu0 0
      %333 = vmatpush1.bf16.msra.mxu0 %v330
      %334 = vmatprep.subr.bf16.mxu0 0
      %335 = vmatpush1.bf16.msra.mxu0 0
      %336 = vmatprep.subr.bf16.mxu0 0
      %337 = vmatpush1.bf16.msra.mxu0 0
      %338 = vmatprep.subr.bf16.mxu0 0
      %339 = vmatpush1.bf16.msra.mxu0 0
      %340 = vmatprep.subr.bf16.mxu0 0
      %341 = vmatpush1.bf16.msra.mxu0 0
      %342 = vmatprep.subr.bf16.mxu0 0
      %343 = vmatpush1.bf16.msra.mxu0 0
      %344 = vmatprep.subr.bf16.mxu0 0
      %345 = vmatpush1.bf16.msra.mxu0 0
      %346 = vmatprep.subr.bf16.mxu0 0
      %347 = vmatpush1.bf16.msra.mxu0 0
      %348 = vmatprep.subr.bf16.mxu0 0
      %349 = vmatpush1.bf16.msra.mxu0 0
      %350 = vmatprep.subr.bf16.mxu0 0
      %351 = vmatpush1.bf16.msra.mxu0 0
      %352 = vmatprep.subr.bf16.mxu0 0
      %353 = vmatpush1.bf16.msra.mxu0 0
      %354 = vmatprep.subr.bf16.mxu0 0
      %355 = vmatpush1.bf16.msra.mxu0 0
      %356 = vmatprep.subr.bf16.mxu0 0
      %357 = vmatpush1.bf16.msra.mxu0 0
      %358 = vmatprep.subr.bf16.mxu0 0
      %359 = vmatpush1.bf16.msra.mxu0 0
      %360 = vmatprep.subr.bf16.mxu0 0
      %361 = vmatpush1.bf16.msra.mxu0 0
      %362 = vmatprep.subr.bf16.mxu0 0
      %363 = vmatpush1.bf16.msra.mxu0 0
      %364 = vmatprep.mubr.bf16.mxu0 0
      %365 = vmatmul.mubr.bf16.gmra.mrb[0].mxu0 %v326
      %v366 = vpop.f32.mrb[0].mxu0
      %v367 = vadd.f32 0.0, %v366
      %v368 = vpop.f32.mrb[0].mxu0
      %v369 = vpop.f32.mrb[0].mxu0
      %v370 = vpop.f32.mrb[0].mxu0
      %371 = vdwg.mxu0
      %v372 = vrcp.pop %v323
      %v373 = vmul.f32 %v367, %v372
      %v374 = vpack.c.bf16 %v373, %v373
      %vm375 = vcmask 60416
      %376 = vst.msk [vmem:[%s263] sm:$0xf] %vm375, %v374
      %p377 = scmp.lt.s32.totalorder %s18, 1
      %s378 = scalar_select %p377, %s18, 1
      %p379 = scmp.lt.s32.totalorder %s19, 3
      %s380 = scalar_select %p379, %s19, 3
      %s381 = smul.addr %s378, 4
      %s382 = sadd.s32 %s380, %s381
      %s383 = smul.addr %s382, 4
      %s384 = scalar_lea.vmem %s3, %s383
      // Predicated region
      $region33: #{transformer_encode_block.4} parent=31 // pred_check
        %p385 = pneg %p130
      $region34: #{transformer_encode_block.4} parent=31 // pred_check_branch
        %387 = sbr.rel (%p385) target = $region36
      $region35: #{transformer_encode_block.4} parent=31 // pred_region
        _
      $region36: #{transformer_encode_block.4} parent=31 // pred_fallthru
        _
    $region32: #{transformer_encode_block.4} parent=5 // pred_fallthru
      _
    %p388 = scmp.le.s32.totalorder 2, %s9
    // Predicated region
    $region37: #{transformer_encode_block.4} parent=5 // pred_check
      %p389 = pneg %p388
    $region38: #{transformer_encode_block.4} parent=5 // pred_check_branch
      %391 = sbr.rel (%p389) target = $region40
    $region39: #{transformer_encode_block.4} parent=5 // pred_region
      %s392 = ssub.s32 %s9, 2
      // Predicated region
      $region41: #{transformer_encode_block.4} parent=39 // pred_check
        %p393 = pneg %p136
      $region42: #{transformer_encode_block.4} parent=39 // pred_check_branch
        %395 = sbr.rel (%p393) target = $region44
      $region43: #{transformer_encode_block.4} parent=39 // pred_region
        %p396 = scmp.lt.s32.totalorder %s20, 1
        %s397 = scalar_select %p396, %s20, 1
        %p398 = scmp.lt.s32.totalorder %s21, 3
        %s399 = scalar_select %p398, %s21, 3
        %s400 = smul.addr %s397, 4
        %s401 = sadd.s32 %s399, %s400
        %s402 = smul.addr %s401, 4
        %s403 = scalar_lea.vmem %s3, %s402
      $region44: #{transformer_encode_block.4} parent=39 // pred_fallthru
        _
    $region40: #{transformer_encode_block.4} parent=5 // pred_fallthru
      _
  $region6: #{transformer_encode_block.4} parent=0 // loop_footer
    %s13 = sadd.s32 1, %s9
  $region7: #{transformer_encode_block.4} parent=0 // loop_footer_branch
    %8 = sbr.rel target = $region3
  $region8: #{transformer_encode_block.4} parent=0 // loop_exit
    _

// kernel: transformer_encode_block.3
$region0: #{transformer_encode_block.3}
  #allocation0 [shape = 'u32[]', space=smem, size = 0x4, offset = 0x4, fixed_abs, tag = 'smem constant byte address 0x4 - core index']
  #allocation1 [shape = 'u32[144,128]{1,0:T(1,128)}', space=vmem, size = 0x12000, scoped, tag = 'internal scratch']
  %s0 = inlined_call_operand.hbm [shape: f32[16,32], index: 0, kind: input, shape index: {}]
  %s1 = inlined_call_operand.vmem [shape: bf16[32,96], index: 1, kind: input, shape index: {}]
  %s2 = inlined_call_operand.vmem [shape: f32[1,96], index: 2, kind: input, shape index: {}]
  %s3 = inlined_call_operand.vmem [shape: bf16[16,32], index: 3, kind: output, shape index: {0}]
  %s4 = inlined_call_operand.vmem [shape: bf16[16,32], index: 4, kind: output, shape index: {1}]
  %s5 = inlined_call_operand.vmem [shape: bf16[16,32], index: 5, kind: output, shape index: {2}]
  %6 = xla_tuple %s3, %s4, %s5
  %s7 = sld [smem:[#allocation0]]
  $region65: #{transformer_encode_block.3} parent=0
    _
  %s9 = ssub.s32 1, %s7
  %s10 = scalar_select 0, %s9, %s7
  $region1: #{transformer_encode_block.3} parent=0
    #allocation2 [shape = 'u8[8192]{0}', space=vmem, size = 0x2000, scoped, tag = 'input window, operand 0']
    #allocation3 [shape = 's32[2]{0}', space=sflag, size = 0x8, scoped, tag = 'scoped memory for transformer_encode_block.3']
    %11 = vsyncpa [#allocation3], 0
    %s12 = scalar_lea.sflag [#allocation3], 1
    %13 = vsyncpa %s12, 0
    loop: start=0, step=1, limit=4
    $region2: #{transformer_encode_block.3} parent=1 // loop_pre_header
      _
    $region3: #{transformer_encode_block.3} parent=1 // loop_header
      %s15 = sphi 0, %s19
      %p16 = scmp.ge.s32.totalorder %s15, 4
      %s25 = sphi 0, %s27
      %s28 = sphi 0, %s25
      %s29 = sphi 0, %s28
      %s45 = sphi 0, %s29
      %s49 = sphi 0, %s49
      %s51 = sphi 0, %s49
      %s52 = sphi 0, %s51
      %s66 = sphi 0, %s52
      %s70 = sphi 0, %s70
      %s72 = sphi 0, %s70
      %s73 = sphi 0, %s72
      %s87 = sphi 0, %s73
      %s93 = sphi 0, %s95
      %s96 = sphi 0, %s93
      %s97 = sphi 0, %s96
      %s113 = sphi 0, %s97
      %s119 = sphi 0, %s121
      %s122 = sphi 0, %s119
      %s123 = sphi 0, %s122
      %s139 = sphi 0, %s123
      %s145 = sphi 0, %s147
      %s148 = sphi 0, %s145
      %s149 = sphi 0, %s148
      %s165 = sphi 0, %s149
    $region4: #{transformer_encode_block.3} parent=1 // loop_header_branch
      %18 = sbr.rel (%p16) target = $region8
    $region5: #{transformer_encode_block.3} parent=1 // loop_body
      %s20 = ssub.s32 %s15, 1
      %s21 = ssub.s32 %s15, 2
      %s22 = sadd.s32 %s15, 1
      %s23 = ssub.s32 %s15, %s22
      %p24 = scmp.eq.s32.totalorder %s23, 0
      %s26 = sadd.s32 %s25, 1
      %s27 = scalar_select %p24, %s25, %s26
      %p30 = pneg %p24
      %p31 = scmp.eq.s32.totalorder %s15, 1
      %p32 = por %p30, %p31
      %p33 = scmp.ne.s32.totalorder %s25, %s28
      %p34 = scmp.eq.s32.totalorder %s15, 0
      %p35 = por %p33, %p34
      %p36 = scmp.ne.s32.totalorder %s25, %s28
      %p37 = scmp.eq.s32.totalorder %s20, 1
      %p38 = por %p36, %p37
      %p39 = scmp.ne.s32.totalorder %s28, %s29
      %p40 = scmp.eq.s32.totalorder %s20, 0
      %p41 = por %p39, %p40
      %p42 = scmp.ne.s32.totalorder %s28, %s29
      %p43 = scmp.eq.s32.totalorder %s21, 1
      %p44 = por %p42, %p43
      %p46 = scmp.ne.s32.totalorder %s29, %s45
      %p47 = scmp.eq.s32.totalorder %s21, 0
      %p48 = por %p46, %p47
      %s50 = sadd.s32 %s49, 1
      %p53 = scmp.eq.s32.totalorder %s15, 1
      %p54 = scmp.ne.s32.totalorder %s49, %s51
      %p55 = scmp.eq.s32.totalorder %s15, 0
      %p56 = por %p54, %p55
      %p57 = scmp.ne.s32.totalorder %s49, %s51
      %p58 = scmp.eq.s32.totalorder %s20, 1
      %p59 = por %p57, %p58
      %p60 = scmp.ne.s32.totalorder %s51, %s52
      %p61 = scmp.eq.s32.totalorder %s20, 0
      %p62 = por %p60, %p61
      %p63 = scmp.ne.s32.totalorder %s51, %s52
      %p64 = scmp.eq.s32.totalorder %s21, 1
      %p65 = por %p63, %p64
      %p67 = scmp.ne.s32.totalorder %s52, %s66
      %p68 = scmp.eq.s32.totalorder %s21, 0
      %p69 = por %p67, %p68
      %s71 = sadd.s32 %s70, 1
      %p74 = scmp.eq.s32.totalorder %s15, 1
      %p75 = scmp.ne.s32.totalorder %s70, %s72
      %p76 = scmp.eq.s32.totalorder %s15, 0
      %p77 = por %p75, %p76
      %p78 = scmp.ne.s32.totalorder %s70, %s72
      %p79 = scmp.eq.s32.totalorder %s20, 1
      %p80 = por %p78, %p79
      %p81 = scmp.ne.s32.totalorder %s72, %s73
      %p82 = scmp.eq.s32.totalorder %s20, 0
      %p83 = por %p81, %p82
      %p84 = scmp.ne.s32.totalorder %s72, %s73
      %p85 = scmp.eq.s32.totalorder %s21, 1
      %p86 = por %p84, %p85
      %p88 = scmp.ne.s32.totalorder %s73, %s87
      %p89 = scmp.eq.s32.totalorder %s21, 0
      %p90 = por %p88, %p89
      %s91 = ssub.s32 %s15, %s22
      %p92 = scmp.eq.s32.totalorder %s91, 0
      %s94 = sadd.s32 %s93, 1
      %s95 = scalar_select %p92, %s93, %s94
      %p98 = pneg %p92
      %p99 = scmp.eq.s32.totalorder %s15, 1
      %p100 = por %p98, %p99
      %p101 = scmp.ne.s32.totalorder %s93, %s96
      %p102 = scmp.eq.s32.totalorder %s15, 0
      %p103 = por %p101, %p102
      %p104 = scmp.ne.s32.totalorder %s93, %s96
      %p105 = scmp.eq.s32.totalorder %s20, 1
      %p106 = por %p104, %p105
      %p107 = scmp.ne.s32.totalorder %s96, %s97
      %p108 = scmp.eq.s32.totalorder %s20, 0
      %p109 = por %p107, %p108
      %p110 = scmp.ne.s32.totalorder %s96, %s97
      %p111 = scmp.eq.s32.totalorder %s21, 1
      %p112 = por %p110, %p111
      %p114 = scmp.ne.s32.totalorder %s97, %s113
      %p115 = scmp.eq.s32.totalorder %s21, 0
      %p116 = por %p114, %p115
      %s117 = ssub.s32 %s15, %s22
      %p118 = scmp.eq.s32.totalorder %s117, 0
      %s120 = sadd.s32 %s119, 1
      %s121 = scalar_select %p118, %s119, %s120
      %p124 = pneg %p118
      %p125 = scmp.eq.s32.totalorder %s15, 1
      %p126 = por %p124, %p125
      %p127 = scmp.ne.s32.totalorder %s119, %s122
      %p128 = scmp.eq.s32.totalorder %s15, 0
      %p129 = por %p127, %p128
      %p130 = scmp.ne.s32.totalorder %s119, %s122
      %p131 = scmp.eq.s32.totalorder %s20, 1
      %p132 = por %p130, %p131
      %p133 = scmp.ne.s32.totalorder %s122, %s123
      %p134 = scmp.eq.s32.totalorder %s20, 0
      %p135 = por %p133, %p134
      %p136 = scmp.ne.s32.totalorder %s122, %s123
      %p137 = scmp.eq.s32.totalorder %s21, 1
      %p138 = por %p136, %p137
      %p140 = scmp.ne.s32.totalorder %s123, %s139
      %p141 = scmp.eq.s32.totalorder %s21, 0
      %p142 = por %p140, %p141
      %s143 = ssub.s32 %s15, %s22
      %p144 = scmp.eq.s32.totalorder %s143, 0
      %s146 = sadd.s32 %s145, 1
      %s147 = scalar_select %p144, %s145, %s146
      %p150 = pneg %p144
      %p151 = scmp.eq.s32.totalorder %s15, 1
      %p152 = por %p150, %p151
      %p153 = scmp.ne.s32.totalorder %s145, %s148
      %p154 = scmp.eq.s32.totalorder %s15, 0
      %p155 = por %p153, %p154
      %p156 = scmp.ne.s32.totalorder %s145, %s148
      %p157 = scmp.eq.s32.totalorder %s20, 1
      %p158 = por %p156, %p157
      %p159 = scmp.ne.s32.totalorder %s148, %s149
      %p160 = scmp.eq.s32.totalorder %s20, 0
      %p161 = por %p159, %p160
      %p162 = scmp.ne.s32.totalorder %s148, %s149
      %p163 = scmp.eq.s32.totalorder %s21, 1
      %p164 = por %p162, %p163
      %p166 = scmp.ne.s32.totalorder %s149, %s165
      %p167 = scmp.eq.s32.totalorder %s21, 0
      %p168 = por %p166, %p167
      %p169 = scmp.le.s32.totalorder 1, %s15
      %p170 = scmp.lt.s32.totalorder %s15, 3
      %p171 = pnand %p169, %p170
      %p172 = pneg %p171
      // Predicated region
      $region9: #{transformer_encode_block.3} parent=5 // pred_check
        _
      $region10: #{transformer_encode_block.3} parent=5 // pred_check_branch
        %174 = sbr.rel (%p171) target = $region12
      $region11: #{transformer_encode_block.3} parent=5 // pred_region
        %s175 = ssub.s32 %s15, 1
        // Predicated region
        $region13: #{transformer_encode_block.3} parent=11 // pred_check
          %p176 = pneg %p62
        $region14: #{transformer_encode_block.3} parent=11 // pred_check_branch
          %178 = sbr.rel (%p176) target = $region16
        $region15: #{transformer_encode_block.3} parent=11 // pred_region
          _
        $region16: #{transformer_encode_block.3} parent=11 // pred_fallthru
          _
        // Predicated region
        $region17: #{transformer_encode_block.3} parent=11 // pred_check
          %p179 = pneg %p83
        $region18: #{transformer_encode_block.3} parent=11 // pred_check_branch
          %181 = sbr.rel (%p179) target = $region20
        $region19: #{transformer_encode_block.3} parent=11 // pred_region
          _
        $region20: #{transformer_encode_block.3} parent=11 // pred_fallthru
          _
      $region12: #{transformer_encode_block.3} parent=5 // pred_fallthru
        _
      %p182 = scmp.lt.s32.totalorder %s15, 2
      // Predicated region
      $region21: #{transformer_encode_block.3} parent=5 // pred_check
        %p183 = pneg %p182
      $region22: #{transformer_encode_block.3} parent=5 // pred_check_branch
        %185 = sbr.rel (%p183) target = $region24
      $region23: #{transformer_encode_block.3} parent=5 // pred_region
        // Predicated region
        $region25: #{transformer_encode_block.3} parent=23 // pred_check
          %p186 = pneg %p35
        $region26: #{transformer_encode_block.3} parent=23 // pred_check_branch
          %188 = sbr.rel (%p186) target = $region28
        $region27: #{transformer_encode_block.3} parent=23 // pred_region
          %s189 = sand.u32 %s25, 1
          %s190 = scalar_lea.sflag [#allocation3], %s189
          %s191 = sand.u32 %s25, 1
          %s192 = smul.addr %s191, 8
          %s193 = scalar_lea.vmem [#allocation2], %s192
          %s195 = ssub.s32 128, 128
          %196 = vsyncadd %s190, %s195
          %s197 = smul.addr %s15, 128
          %s198 = scalar_lea.hbm %s0, %s197
          %s200 = sshll.u32 %s193, 4
          %s201 = int_to_ptr.vmem [resolvable:$true] %s200
          %203 = dma.hbm_to_vmem [thread:$0]  %s198, 128, %s201, %s190
        $region28: #{transformer_encode_block.3} parent=23 // pred_fallthru
          _
      $region24: #{transformer_encode_block.3} parent=5 // pred_fallthru
        _
      %p204 = scmp.le.s32.totalorder 1, %s15
      %p205 = scmp.lt.s32.totalorder %s15, 3
      %p206 = pnand %p204, %p205
      %p207 = pneg %p206
      // Predicated region
      $region29: #{transformer_encode_block.3} parent=5 // pred_check
        _
      $region30: #{transformer_encode_block.3} parent=5 // pred_check_branch
        %209 = sbr.rel (%p206) target = $region32
      $region31: #{transformer_encode_block.3} parent=5 // pred_region
        %s210 = ssub.s32 %s15, 1
        %s211 = sand.u32 %s28, 1
        %s212 = scalar_lea.sflag [#allocation3], %s211
        %s213 = sand.u32 %s28, 1
        %s214 = smul.addr %s213, 8
        %s215 = scalar_lea.vmem [#allocation2], %s214
        // Predicated region
        $region33: #{transformer_encode_block.3} parent=31 // pred_check
          %p216 = pneg %p41
        $region34: #{transformer_encode_block.3} parent=31 // pred_check_branch
          %218 = sbr.rel (%p216) target = $region36
        $region35: #{transformer_encode_block.3} parent=31 // pred_region
          %219 = dma.done %s212, 128
        $region36: #{transformer_encode_block.3} parent=31 // pred_fallthru
          _
        %s220 = sand.u32 %s28, 1
        %s221 = scalar_lea.sflag [#allocation3], %s220
        %s222 = sand.u32 %s28, 1
        %s223 = smul.addr %s222, 8
        %s224 = scalar_lea.vmem [#allocation2], %s223
        %p225 = pneg %p41
        %p226 = pneg %p38
        %p227 = pneg %p62
        %p228 = pneg %p59
        %p229 = pneg %p83
        %p230 = pneg %p80
        %p231 = pneg %p109
        %p232 = pneg %p106
        %p233 = scmp.lt.s32.totalorder %s20, 1
        %s234 = scalar_select %p233, %s20, 1
        %s235 = smul.addr %s234, 4
        %s236 = scalar_lea.vmem %s3, %s235
        %p237 = pneg %p135
        %p238 = pneg %p132
        %p239 = scmp.lt.s32.totalorder %s20, 1
        %s240 = scalar_select %p239, %s20, 1
        %s241 = smul.addr %s240, 4
        %s242 = scalar_lea.vmem %s4, %s241
        %p243 = pneg %p161
        %p244 = pneg %p158
        %p245 = scmp.lt.s32.totalorder %s20, 1
        %s246 = scalar_select %p245, %s20, 1
        %s247 = smul.addr %s246, 4
        %s248 = scalar_lea.vmem %s5, %s247
        %p249 = scmp.lt.s32.totalorder %s20, 1
        %s250 = scalar_select %p249, %s20, 1
        %s251 = smul.addr %s250, 4
        %s252 = scalar_lea.vmem %s3, %s251
        %p253 = scmp.lt.s32.totalorder %s20, 1
        %s254 = scalar_select %p253, %s20, 1
        %s255 = smul.addr %s254, 4
        %s256 = scalar_lea.vmem %s4, %s255
        %p257 = scmp.lt.s32.totalorder %s20, 1
        %s258 = scalar_select %p257, %s20, 1
        %s259 = smul.addr %s258, 4
        %s260 = scalar_lea.vmem %s5, %s259
        %v262 = vld [vmem:[%s215] sm:$0xff]
        %v263 = vpack.c.bf16 %v262, %v262
        %v264 = vld [vmem:[%s1] sm:$0xf]
        %v265 = vld [vmem:[%s1 + $0x4] sm:$0xf]
        %v266 = vld [vmem:[%s1 + $0x8] sm:$0xf]
        %v267 = vld [vmem:[%s1 + $0xc] sm:$0xf]
        %v268 = vld [vmem:[%s2] sm:$0x1]
        %v270 = vlaneseq
        %v271 = vshrl.u32 %v270, 7
        %v272 = vsub.s32 0, %v271
        %v273 = vrot.slane %v268, %v272
        %v279 = vunpack.c.l.b16 %v264
        %v280 = vunpack.c.l.b16 %v265
        %v281 = vunpack.c.l.b16 %v266
        %v282 = vunpack.c.l.b16 %v267
        %v283 = vpack.c.b16 %v280, %v279
        %v284 = vpack.c.b16 %v282, %v281
        %vm287 = vcmask 261120
        %v289 = vsel %vm287, %v263, 0
        %291 = vmatprep.subr.bf16.mxu0 0
        %292 = vmatpush1.bf16.msra.mxu0 %v283
        %293 = vmatprep.subr.bf16.mxu0 0
        %294 = vmatpush1.bf16.msra.mxu0 %v284
        %295 = vmatprep.subr.bf16.mxu0 0
        %296 = vmatpush1.bf16.msra.mxu0 0
        %297 = vmatprep.subr.bf16.mxu0 0
        %298 = vmatpush1.bf16.msra.mxu0 0
        %299 = vmatprep.subr.bf16.mxu0 0
        %300 = vmatpush1.bf16.msra.mxu0 0
        %301 = vmatprep.subr.bf16.mxu0 0
        %302 = vmatpush1.bf16.msra.mxu0 0
        %303 = vmatprep.subr.bf16.mxu0 0
        %304 = vmatpush1.bf16.msra.mxu0 0
        %305 = vmatprep.subr.bf16.mxu0 0
        %306 = vmatpush1.bf16.msra.mxu0 0
        %307 = vmatprep.subr.bf16.mxu0 0
        %308 = vmatpush1.bf16.msra.mxu0 0
        %309 = vmatprep.subr.bf16.mxu0 0
        %310 = vmatpush1.bf16.msra.mxu0 0
        %311 = vmatprep.subr.bf16.mxu0 0
        %312 = vmatpush1.bf16.msra.mxu0 0
        %313 = vmatprep.subr.bf16.mxu0 0
        %314 = vmatpush1.bf16.msra.mxu0 0
        %315 = vmatprep.subr.bf16.mxu0 0
        %316 = vmatpush1.bf16.msra.mxu0 0
        %317 = vmatprep.subr.bf16.mxu0 0
        %318 = vmatpush1.bf16.msra.mxu0 0
        %319 = vmatprep.subr.bf16.mxu0 0
        %320 = vmatpush1.bf16.msra.mxu0 0
        %321 = vmatprep.subr.bf16.mxu0 0
        %322 = vmatpush1.bf16.msra.mxu0 0
        %323 = vmatprep.mubr.bf16.mxu0 0
        %324 = vmatmul.mubr.bf16.gmra.mrb[0].mxu0 %v289
        %v325 = vpop.f32.mrb[0].mxu0
        %v326 = vadd.f32 %v273, %v325
        %v327 = vpop.f32.mrb[0].mxu0
        %v328 = vpop.f32.mrb[0].mxu0
        %v329 = vpop.f32.mrb[0].mxu0
        %330 = vdwg.mxu0
        %v331 = vpack.c.bf16 %v326, %v326
        %vm332 = vcmask 257024
        %333 = vst.msk [vmem:[%s252] sm:$0xf] %vm332, %v331
        %v335 = vunpack.c.l.b16 %v331
        %v336 = vpack.c.b16 %v335, %v335
        %337 = vrot.lane.b32.xlu0 %v336, 96
        %v338 = vpop.permute.xlu0 %337
        %340 = vst.msk [vmem:[%s256] sm:$0xf] %vm332, %v338
        %341 = vrot.lane.b32.xlu0 %v336, 64
        %v342 = vpop.permute.xlu0 %341
        %344 = vst.msk [vmem:[%s260] sm:$0xf] %vm332, %v342
        %p345 = scmp.lt.s32.totalorder %s20, 1
        %s346 = scalar_select %p345, %s20, 1
        %s347 = smul.addr %s346, 4
        %s348 = scalar_lea.vmem %s3, %s347
        %p349 = scmp.lt.s32.totalorder %s20, 1
        %s350 = scalar_select %p349, %s20, 1
        %s351 = smul.addr %s350, 4
        %s352 = scalar_lea.vmem %s4, %s351
        %p353 = scmp.lt.s32.totalorder %s20, 1
        %s354 = scalar_select %p353, %s20, 1
        %s355 = smul.addr %s354, 4
        %s356 = scalar_lea.vmem %s5, %s355
        // Predicated region
        $region37: #{transformer_encode_block.3} parent=31 // pred_check
          %p357 = pneg %p106
        $region38: #{transformer_encode_block.3} parent=31 // pred_check_branch
          %359 = sbr.rel (%p357) target = $region40
        $region39: #{transformer_encode_block.3} parent=31 // pred_region
          _
        $region40: #{transformer_encode_block.3} parent=31 // pred_fallthru
          _
        // Predicated region
        $region41: #{transformer_encode_block.3} parent=31 // pred_check
          %p360 = pneg %p132
        $region42: #{transformer_encode_block.3} parent=31 // pred_check_branch
          %362 = sbr.rel (%p360) target = $region44
        $region43: #{transformer_encode_block.3} parent=31 // pred_region
          _
        $region44: #{transformer_encode_block.3} parent=31 // pred_fallthru
          _
        // Predicated region
        $region45: #{transformer_encode_block.3} parent=31 // pred_check
          %p363 = pneg %p158
        $region46: #{transformer_encode_block.3} parent=31 // pred_check_branch
          %365 = sbr.rel (%p363) target = $region48
        $region47: #{transformer_encode_block.3} parent=31 // pred_region
          _
        $region48: #{transformer_encode_block.3} parent=31 // pred_fallthru
          _
      $region32: #{transformer_encode_block.3} parent=5 // pred_fallthru
        _
      %p366 = scmp.le.s32.totalorder 2, %s15
      // Predicated region
      $region49: #{transformer_encode_block.3} parent=5 // pred_check
        %p367 = pneg %p366
      $region50: #{transformer_encode_block.3} parent=5 // pred_check_branch
        %369 = sbr.rel (%p367) target = $region52
      $region51: #{transformer_encode_block.3} parent=5 // pred_region
        %s370 = ssub.s32 %s15, 2
        // Predicated region
        $region53: #{transformer_encode_block.3} parent=51 // pred_check
          %p371 = pneg %p112
        $region54: #{transformer_encode_block.3} parent=51 // pred_check_branch
          %373 = sbr.rel (%p371) target = $region56
        $region55: #{transformer_encode_block.3} parent=51 // pred_region
          %p374 = scmp.lt.s32.totalorder %s21, 1
          %s375 = scalar_select %p374, %s21, 1
          %s376 = smul.addr %s375, 4
          %s377 = scalar_lea.vmem %s3, %s376
        $region56: #{transformer_encode_block.3} parent=51 // pred_fallthru
          _
        // Predicated region
        $region57: #{transformer_encode_block.3} parent=51 // pred_check
          %p378 = pneg %p138
        $region58: #{transformer_encode_block.3} parent=51 // pred_check_branch
          %380 = sbr.rel (%p378) target = $region60
        $region59: #{transformer_encode_block.3} parent=51 // pred_region
          %p381 = scmp.lt.s32.totalorder %s21, 1
          %s382 = scalar_select %p381, %s21, 1
          %s383 = smul.addr %s382, 4
          %s384 = scalar_lea.vmem %s4, %s383
        $region60: #{transformer_encode_block.3} parent=51 // pred_fallthru
          _
        // Predicated region
        $region61: #{transformer_encode_block.3} parent=51 // pred_check
          %p385 = pneg %p164
        $region62: #{transformer_encode_block.3} parent=51 // pred_check_branch
          %387 = sbr.rel (%p385) target = $region64
        $region63: #{transformer_encode_block.3} parent=51 // pred_region
          %p388 = scmp.lt.s32.totalorder %s21, 1
          %s389 = scalar_select %p388, %s21, 1
          %s390 = smul.addr %s389, 4
          %s391 = scalar_lea.vmem %s5, %s390
        $region64: #{transformer_encode_block.3} parent=51 // pred_fallthru
          _
      $region52: #{transformer_encode_block.3} parent=5 // pred_fallthru
        _
    $region6: #{transformer_encode_block.3} parent=1 // loop_footer
      %s19 = sadd.s32 1, %s15
    $region7: #{transformer_encode_block.3} parent=1 // loop_footer_branch
      %14 = sbr.rel target = $region3
    $region8: #{transformer_encode_block.3} parent=1 // loop_exit
      _
    %392 = vsyncpa [#allocation3], 1
    %s393 = scalar_lea.sflag [#allocation3], 1
    %394 = vsyncpa %s393, 1

// kernel: transformer_encode_block.5
$region0: #{transformer_encode_block.5}
  #allocation0 [shape = 'u32[]', space=smem, size = 0x4, offset = 0x4, fixed_abs, tag = 'smem constant byte address 0x4 - core index']
  #allocation1 [shape = 'u32[144,128]{1,0:T(1,128)}', space=vmem, size = 0x12000, scoped, tag = 'internal scratch']
  %s0 = inlined_call_operand.vmem [shape: f32[16,32], index: 0, kind: input, shape index: {}]
  %s1 = inlined_call_operand.vmem [shape: bf16[16,32], index: 1, kind: input, shape index: {}]
  %s2 = inlined_call_operand.vmem [shape: bf16[32,32], index: 2, kind: input, shape index: {}]
  %s3 = inlined_call_operand.vmem [shape: f32[1,32], index: 3, kind: input, shape index: {}]
  %s4 = inlined_call_operand.vmem [shape: f32[1,32], index: 4, kind: input, shape index: {}]
  %s5 = inlined_call_operand.vmem [shape: f32[1,32], index: 5, kind: input, shape index: {}]
  %s6 = inlined_call_operand.vmem [shape: bf16[32,128], index: 6, kind: input, shape index: {}]
  %s7 = inlined_call_operand.vmem [shape: f32[1,128], index: 7, kind: input, shape index: {}]
  %s8 = inlined_call_operand.vmem [shape: bf16[128,32], index: 8, kind: input, shape index: {}]
  %s9 = inlined_call_operand.vmem [shape: f32[1,32], index: 9, kind: input, shape index: {}]
  %s10 = inlined_call_operand.hbm [shape: f32[16,32], index: 10, kind: output, shape index: {}]
  %s11 = sld [smem:[#allocation0]]
  $region73: #{transformer_encode_block.5} parent=0
    _
  %s13 = ssub.s32 1, %s11
  %s14 = scalar_select 0, %s13, %s11
  $region1: #{transformer_encode_block.5} parent=0
    #allocation2 [shape = 'u8[8192]{0}', space=vmem, size = 0x2000, scoped, tag = 'output window, operand 0']
    #allocation3 [shape = 's32[2]{0}', space=sflag, size = 0x8, scoped, tag = 'scoped memory for transformer_encode_block.5']
    %15 = vsyncpa [#allocation3], 0
    %s16 = scalar_lea.sflag [#allocation3], 1
    %17 = vsyncpa %s16, 0
    loop: start=0, step=1, limit=4
    $region2: #{transformer_encode_block.5} parent=1 // loop_pre_header
      _
    $region3: #{transformer_encode_block.5} parent=1 // loop_header
      %s19 = sphi 0, %s23
      %p20 = scmp.ge.s32.totalorder %s19, 4
      %s29 = sphi 0, %s31
      %s32 = sphi 0, %s29
      %s33 = sphi 0, %s32
      %s49 = sphi 0, %s33
      %s55 = sphi 0, %s57
      %s58 = sphi 0, %s55
      %s59 = sphi 0, %s58
      %s75 = sphi 0, %s59
      %s79 = sphi 0, %s79
      %s81 = sphi 0, %s79
      %s82 = sphi 0, %s81
      %s96 = sphi 0, %s82
      %s100 = sphi 0, %s100
      %s102 = sphi 0, %s100
      %s103 = sphi 0, %s102
      %s117 = sphi 0, %s103
      %s121 = sphi 0, %s121
      %s123 = sphi 0, %s121
      %s124 = sphi 0, %s123
      %s138 = sphi 0, %s124
      %s142 = sphi 0, %s142
      %s144 = sphi 0, %s142
      %s145 = sphi 0, %s144
      %s159 = sphi 0, %s145
      %s163 = sphi 0, %s163
      %s165 = sphi 0, %s163
      %s166 = sphi 0, %s165
      %s180 = sphi 0, %s166
      %s184 = sphi 0, %s184
      %s186 = sphi 0, %s184
      %s187 = sphi 0, %s186
      %s201 = sphi 0, %s187
      %s205 = sphi 0, %s205
      %s207 = sphi 0, %s205
      %s208 = sphi 0, %s207
      %s222 = sphi 0, %s208
      %s226 = sphi 0, %s226
      %s228 = sphi 0, %s226
      %s229 = sphi 0, %s228
      %s243 = sphi 0, %s229
      %s249 = sphi 0, %s251
      %s252 = sphi 0, %s249
      %s253 = sphi 0, %s252
      %s269 = sphi 0, %s253
    $region4: #{transformer_encode_block.5} parent=1 // loop_header_branch
      %22 = sbr.rel (%p20) target = $region8
    $region5: #{transformer_encode_block.5} parent=1 // loop_body
      %s24 = ssub.s32 %s19, 1
      %s25 = ssub.s32 %s19, 2
      %s26 = sadd.s32 %s19, 1
      %s27 = ssub.s32 %s19, %s26
      %p28 = scmp.eq.s32.totalorder %s27, 0
      %s30 = sadd.s32 %s29, 1
      %s31 = scalar_select %p28, %s29, %s30
      %p34 = pneg %p28
      %p35 = scmp.eq.s32.totalorder %s19, 1
      %p36 = por %p34, %p35
      %p37 = scmp.ne.s32.totalorder %s29, %s32
      %p38 = scmp.eq.s32.totalorder %s19, 0
      %p39 = por %p37, %p38
      %p40 = scmp.ne.s32.totalorder %s29, %s32
      %p41 = scmp.eq.s32.totalorder %s24, 1
      %p42 = por %p40, %p41
      %p43 = scmp.ne.s32.totalorder %s32, %s33
      %p44 = scmp.eq.s32.totalorder %s24, 0
      %p45 = por %p43, %p44
      %p46 = scmp.ne.s32.totalorder %s32, %s33
      %p47 = scmp.eq.s32.totalorder %s25, 1
      %p48 = por %p46, %p47
      %p50 = scmp.ne.s32.totalorder %s33, %s49
      %p51 = scmp.eq.s32.totalorder %s25, 0
      %p52 = por %p50, %p51
      %s53 = ssub.s32 %s19, %s26
      %p54 = scmp.eq.s32.totalorder %s53, 0
      %s56 = sadd.s32 %s55, 1
      %s57 = scalar_select %p54, %s55, %s56
      %p60 = pneg %p54
      %p61 = scmp.eq.s32.totalorder %s19, 1
      %p62 = por %p60, %p61
      %p63 = scmp.ne.s32.totalorder %s55, %s58
      %p64 = scmp.eq.s32.totalorder %s19, 0
      %p65 = por %p63, %p64
      %p66 = scmp.ne.s32.totalorder %s55, %s58
      %p67 = scmp.eq.s32.totalorder %s24, 1
      %p68 = por %p66, %p67
      %p69 = scmp.ne.s32.totalorder %s58, %s59
      %p70 = scmp.eq.s32.totalorder %s24, 0
      %p71 = por %p69, %p70
      %p72 = scmp.ne.s32.totalorder %s58, %s59
      %p73 = scmp.eq.s32.totalorder %s25, 1
      %p74 = por %p72, %p73
      %p76 = scmp.ne.s32.totalorder %s59, %s75
      %p77 = scmp.eq.s32.totalorder %s25, 0
      %p78 = por %p76, %p77
      %s80 = sadd.s32 %s79, 1
      %p83 = scmp.eq.s32.totalorder %s19, 1
      %p84 = scmp.ne.s32.totalorder %s79, %s81
      %p85 = scmp.eq.s32.totalorder %s19, 0
      %p86 = por %p84, %p85
      %p87 = scmp.ne.s32.totalorder %s79, %s81
      %p88 = scmp.eq.s32.totalorder %s24, 1
      %p89 = por %p87, %p88
      %p90 = scmp.ne.s32.totalorder %s81, %s82
      %p91 = scmp.eq.s32.totalorder %s24, 0
      %p92 = por %p90, %p91
      %p93 = scmp.ne.s32.totalorder %s81, %s82
      %p94 = scmp.eq.s32.totalorder %s25, 1
      %p95 = por %p93, %p94
      %p97 = scmp.ne.s32.totalorder %s82, %s96
      %p98 = scmp.eq.s32.totalorder %s25, 0
      %p99 = por %p97, %p98
      %s101 = sadd.s32 %s100, 1
      %p104 = scmp.eq.s32.totalorder %s19, 1
      %p105 = scmp.ne.s32.totalorder %s100, %s102
      %p106 = scmp.eq.s32.totalorder %s19, 0
      %p107 = por %p105, %p106
      %p108 = scmp.ne.s32.totalorder %s100, %s102
      %p109 = scmp.eq.s32.totalorder %s24, 1
      %p110 = por %p108, %p109
      %p111 = scmp.ne.s32.totalorder %s102, %s103
      %p112 = scmp.eq.s32.totalorder %s24, 0
      %p113 = por %p111, %p112
      %p114 = scmp.ne.s32.totalorder %s102, %s103
      %p115 = scmp.eq.s32.totalorder %s25, 1
      %p116 = por %p114, %p115
      %p118 = scmp.ne.s32.totalorder %s103, %s117
      %p119 = scmp.eq.s32.totalorder %s25, 0
      %p120 = por %p118, %p119
      %s122 = sadd.s32 %s121, 1
      %p125 = scmp.eq.s32.totalorder %s19, 1
      %p126 = scmp.ne.s32.totalorder %s121, %s123
      %p127 = scmp.eq.s32.totalorder %s19, 0
      %p128 = por %p126, %p127
      %p129 = scmp.ne.s32.totalorder %s121, %s123
      %p130 = scmp.eq.s32.totalorder %s24, 1
      %p131 = por %p129, %p130
      %p132 = scmp.ne.s32.totalorder %s123, %s124
      %p133 = scmp.eq.s32.totalorder %s24, 0
      %p134 = por %p132, %p133
      %p135 = scmp.ne.s32.totalorder %s123, %s124
      %p136 = scmp.eq.s32.totalorder %s25, 1
      %p137 = por %p135, %p136
      %p139 = scmp.ne.s32.totalorder %s124, %s138
      %p140 = scmp.eq.s32.totalorder %s25, 0
      %p141 = por %p139, %p140
      %s143 = sadd.s32 %s142, 1
      %p146 = scmp.eq.s32.totalorder %s19, 1
      %p147 = scmp.ne.s32.totalorder %s142, %s144
      %p148 = scmp.eq.s32.totalorder %s19, 0
      %p149 = por %p147, %p148
      %p150 = scmp.ne.s32.totalorder %s142, %s144
      %p151 = scmp.eq.s32.totalorder %s24, 1
      %p152 = por %p150, %p151
      %p153 = scmp.ne.s32.totalorder %s144, %s145
      %p154 = scmp.eq.s32.totalorder %s24, 0
      %p155 = por %p153, %p154
      %p156 = scmp.ne.s32.totalorder %s144, %s145
      %p157 = scmp.eq.s32.totalorder %s25, 1
      %p158 = por %p156, %p157
      %p160 = scmp.ne.s32.totalorder %s145, %s159
      %p161 = scmp.eq.s32.totalorder %s25, 0
      %p162 = por %p160, %p161
      %s164 = sadd.s32 %s163, 1
      %p167 = scmp.eq.s32.totalorder %s19, 1
      %p168 = scmp.ne.s32.totalorder %s163, %s165
      %p169 = scmp.eq.s32.totalorder %s19, 0
      %p170 = por %p168, %p169
      %p171 = scmp.ne.s32.totalorder %s163, %s165
      %p172 = scmp.eq.s32.totalorder %s24, 1
      %p173 = por %p171, %p172
      %p174 = scmp.ne.s32.totalorder %s165, %s166
      %p175 = scmp.eq.s32.totalorder %s24, 0
      %p176 = por %p174, %p175
      %p177 = scmp.ne.s32.totalorder %s165, %s166
      %p178 = scmp.eq.s32.totalorder %s25, 1
      %p179 = por %p177, %p178
      %p181 = scmp.ne.s32.totalorder %s166, %s180
      %p182 = scmp.eq.s32.totalorder %s25, 0
      %p183 = por %p181, %p182
      %s185 = sadd.s32 %s184, 1
      %p188 = scmp.eq.s32.totalorder %s19, 1
      %p189 = scmp.ne.s32.totalorder %s184, %s186
      %p190 = scmp.eq.s32.totalorder %s19, 0
      %p191 = por %p189, %p190
      %p192 = scmp.ne.s32.totalorder %s184, %s186
      %p193 = scmp.eq.s32.totalorder %s24, 1
      %p194 = por %p192, %p193
      %p195 = scmp.ne.s32.totalorder %s186, %s187
      %p196 = scmp.eq.s32.totalorder %s24, 0
      %p197 = por %p195, %p196
      %p198 = scmp.ne.s32.totalorder %s186, %s187
      %p199 = scmp.eq.s32.totalorder %s25, 1
      %p200 = por %p198, %p199
      %p202 = scmp.ne.s32.totalorder %s187, %s201
      %p203 = scmp.eq.s32.totalorder %s25, 0
      %p204 = por %p202, %p203
      %s206 = sadd.s32 %s205, 1
      %p209 = scmp.eq.s32.totalorder %s19, 1
      %p210 = scmp.ne.s32.totalorder %s205, %s207
      %p211 = scmp.eq.s32.totalorder %s19, 0
      %p212 = por %p210, %p211
      %p213 = scmp.ne.s32.totalorder %s205, %s207
      %p214 = scmp.eq.s32.totalorder %s24, 1
      %p215 = por %p213, %p214
      %p216 = scmp.ne.s32.totalorder %s207, %s208
      %p217 = scmp.eq.s32.totalorder %s24, 0
      %p218 = por %p216, %p217
      %p219 = scmp.ne.s32.totalorder %s207, %s208
      %p220 = scmp.eq.s32.totalorder %s25, 1
      %p221 = por %p219, %p220
      %p223 = scmp.ne.s32.totalorder %s208, %s222
      %p224 = scmp.eq.s32.totalorder %s25, 0
      %p225 = por %p223, %p224
      %s227 = sadd.s32 %s226, 1
      %p230 = scmp.eq.s32.totalorder %s19, 1
      %p231 = scmp.ne.s32.totalorder %s226, %s228
      %p232 = scmp.eq.s32.totalorder %s19, 0
      %p233 = por %p231, %p232
      %p234 = scmp.ne.s32.totalorder %s226, %s228
      %p235 = scmp.eq.s32.totalorder %s24, 1
      %p236 = por %p234, %p235
      %p237 = scmp.ne.s32.totalorder %s228, %s229
      %p238 = scmp.eq.s32.totalorder %s24, 0
      %p239 = por %p237, %p238
      %p240 = scmp.ne.s32.totalorder %s228, %s229
      %p241 = scmp.eq.s32.totalorder %s25, 1
      %p242 = por %p240, %p241
      %p244 = scmp.ne.s32.totalorder %s229, %s243
      %p245 = scmp.eq.s32.totalorder %s25, 0
      %p246 = por %p244, %p245
      %s247 = ssub.s32 %s19, %s26
      %p248 = scmp.eq.s32.totalorder %s247, 0
      %s250 = sadd.s32 %s249, 1
      %s251 = scalar_select %p248, %s249, %s250
      %p254 = pneg %p248
      %p255 = scmp.eq.s32.totalorder %s19, 1
      %p256 = por %p254, %p255
      %p257 = scmp.ne.s32.totalorder %s249, %s252
      %p258 = scmp.eq.s32.totalorder %s19, 0
      %p259 = por %p257, %p258
      %p260 = scmp.ne.s32.totalorder %s249, %s252
      %p261 = scmp.eq.s32.totalorder %s24, 1
      %p262 = por %p260, %p261
      %p263 = scmp.ne.s32.totalorder %s252, %s253
      %p264 = scmp.eq.s32.totalorder %s24, 0
      %p265 = por %p263, %p264
      %p266 = scmp.ne.s32.totalorder %s252, %s253
      %p267 = scmp.eq.s32.totalorder %s25, 1
      %p268 = por %p266, %p267
      %p270 = scmp.ne.s32.totalorder %s253, %s269
      %p271 = scmp.eq.s32.totalorder %s25, 0
      %p272 = por %p270, %p271
      %p273 = scmp.le.s32.totalorder 1, %s19
      %p274 = scmp.lt.s32.totalorder %s19, 3
      %p275 = pnand %p273, %p274
      %p276 = pneg %p275
      // Predicated region
      $region9: #{transformer_encode_block.5} parent=5 // pred_check
        _
      $region10: #{transformer_encode_block.5} parent=5 // pred_check_branch
        %278 = sbr.rel (%p275) target = $region12
      $region11: #{transformer_encode_block.5} parent=5 // pred_region
        %s279 = ssub.s32 %s19, 1
        // Predicated region
        $region13: #{transformer_encode_block.5} parent=11 // pred_check
          %p280 = pneg %p92
        $region14: #{transformer_encode_block.5} parent=11 // pred_check_branch
          %282 = sbr.rel (%p280) target = $region16
        $region15: #{transformer_encode_block.5} parent=11 // pred_region
          _
        $region16: #{transformer_encode_block.5} parent=11 // pred_fallthru
          _
        // Predicated region
        $region17: #{transformer_encode_block.5} parent=11 // pred_check
          %p283 = pneg %p113
        $region18: #{transformer_encode_block.5} parent=11 // pred_check_branch
          %285 = sbr.rel (%p283) target = $region20
        $region19: #{transformer_encode_block.5} parent=11 // pred_region
          _
        $region20: #{transformer_encode_block.5} parent=11 // pred_fallthru
          _
        // Predicated region
        $region21: #{transformer_encode_block.5} parent=11 // pred_check
          %p286 = pneg %p134
        $region22: #{transformer_encode_block.5} parent=11 // pred_check_branch
          %288 = sbr.rel (%p286) target = $region24
        $region23: #{transformer_encode_block.5} parent=11 // pred_region
          _
        $region24: #{transformer_encode_block.5} parent=11 // pred_fallthru
          _
        // Predicated region
        $region25: #{transformer_encode_block.5} parent=11 // pred_check
          %p289 = pneg %p155
        $region26: #{transformer_encode_block.5} parent=11 // pred_check_branch
          %291 = sbr.rel (%p289) target = $region28
        $region27: #{transformer_encode_block.5} parent=11 // pred_region
          _
        $region28: #{transformer_encode_block.5} parent=11 // pred_fallthru
          _
        // Predicated region
        $region29: #{transformer_encode_block.5} parent=11 // pred_check
          %p292 = pneg %p176
        $region30: #{transformer_encode_block.5} parent=11 // pred_check_branch
          %294 = sbr.rel (%p292) target = $region32
        $region31: #{transformer_encode_block.5} parent=11 // pred_region
          _
        $region32: #{transformer_encode_block.5} parent=11 // pred_fallthru
          _
        // Predicated region
        $region33: #{transformer_encode_block.5} parent=11 // pred_check
          %p295 = pneg %p197
        $region34: #{transformer_encode_block.5} parent=11 // pred_check_branch
          %297 = sbr.rel (%p295) target = $region36
        $region35: #{transformer_encode_block.5} parent=11 // pred_region
          _
        $region36: #{transformer_encode_block.5} parent=11 // pred_fallthru
          _
        // Predicated region
        $region37: #{transformer_encode_block.5} parent=11 // pred_check
          %p298 = pneg %p218
        $region38: #{transformer_encode_block.5} parent=11 // pred_check_branch
          %300 = sbr.rel (%p298) target = $region40
        $region39: #{transformer_encode_block.5} parent=11 // pred_region
          _
        $region40: #{transformer_encode_block.5} parent=11 // pred_fallthru
          _
        // Predicated region
        $region41: #{transformer_encode_block.5} parent=11 // pred_check
          %p301 = pneg %p239
        $region42: #{transformer_encode_block.5} parent=11 // pred_check_branch
          %303 = sbr.rel (%p301) target = $region44
        $region43: #{transformer_encode_block.5} parent=11 // pred_region
          _
        $region44: #{transformer_encode_block.5} parent=11 // pred_fallthru
          _
      $region12: #{transformer_encode_block.5} parent=5 // pred_fallthru
        _
      %p304 = scmp.lt.s32.totalorder %s19, 2
      // Predicated region
      $region45: #{transformer_encode_block.5} parent=5 // pred_check
        %p305 = pneg %p304
      $region46: #{transformer_encode_block.5} parent=5 // pred_check_branch
        %307 = sbr.rel (%p305) target = $region48
      $region47: #{transformer_encode_block.5} parent=5 // pred_region
        // Predicated region
        $region49: #{transformer_encode_block.5} parent=47 // pred_check
          %p308 = pneg %p39
        $region50: #{transformer_encode_block.5} parent=47 // pred_check_branch
          %310 = sbr.rel (%p308) target = $region52
        $region51: #{transformer_encode_block.5} parent=47 // pred_region
          %p311 = scmp.lt.s32.totalorder %s19, 1
          %s312 = scalar_select %p311, %s19, 1
          %s313 = smul.addr %s312, 8
          %s314 = scalar_lea.vmem %s0, %s313
        $region52: #{transformer_encode_block.5} parent=47 // pred_fallthru
          _
        // Predicated region
        $region53: #{transformer_encode_block.5} parent=47 // pred_check
          %p315 = pneg %p65
        $region54: #{transformer_encode_block.5} parent=47 // pred_check_branch
          %317 = sbr.rel (%p315) target = $region56
        $region55: #{transformer_encode_block.5} parent=47 // pred_region
          %p318 = scmp.lt.s32.totalorder %s19, 1
          %s319 = scalar_select %p318, %s19, 1
          %s320 = smul.addr %s319, 4
          %s321 = scalar_lea.vmem %s1, %s320
        $region56: #{transformer_encode_block.5} parent=47 // pred_fallthru
          _
      $region48: #{transformer_encode_block.5} parent=5 // pred_fallthru
        _
      %p322 = scmp.le.s32.totalorder 1, %s19
      %p323 = scmp.lt.s32.totalorder %s19, 3
      %p324 = pnand %p322, %p323
      %p325 = pneg %p324
      // Predicated region
      $region57: #{transformer_encode_block.5} parent=5 // pred_check
        _
      $region58: #{transformer_encode_block.5} parent=5 // pred_check_branch
        %327 = sbr.rel (%p324) target = $region60
      $region59: #{transformer_encode_block.5} parent=5 // pred_region
        %s328 = ssub.s32 %s19, 1
        %p329 = scmp.lt.s32.totalorder %s24, 1
        %s330 = scalar_select %p329, %s24, 1
        %s331 = smul.addr %s330, 8
        %s332 = scalar_lea.vmem %s0, %s331
        %p333 = pneg %p45
        %p334 = pneg %p42
        %p335 = scmp.lt.s32.totalorder %s24, 1
        %s336 = scalar_select %p335, %s24, 1
        %s337 = smul.addr %s336, 4
        %s338 = scalar_lea.vmem %s1, %s337
        %p339 = pneg %p71
        %p340 = pneg %p68
        %p341 = pneg %p92
        %p342 = pneg %p89
        %p343 = pneg %p113
        %p344 = pneg %p110
        %p345 = pneg %p134
        %p346 = pneg %p131
        %p347 = pneg %p155
        %p348 = pneg %p152
        %p349 = pneg %p176
        %p350 = pneg %p173
        %p351 = pneg %p197
        %p352 = pneg %p194
        %p353 = pneg %p218
        %p354 = pneg %p215
        %p355 = pneg %p239
        %p356 = pneg %p236
        %p357 = pneg %p265
        %p358 = pneg %p262
        %s359 = sand.u32 %s252, 1
        %s360 = scalar_lea.sflag [#allocation3], %s359
        %s361 = sand.u32 %s252, 1
        %s362 = smul.addr %s361, 8
        %s363 = scalar_lea.vmem [#allocation2], %s362
        %p364 = scmp.lt.s32.totalorder %s24, 1
        %s365 = scalar_select %p364, %s24, 1
        %s366 = smul.addr %s365, 8
        %s367 = scalar_lea.vmem %s0, %s366
        %p368 = scmp.lt.s32.totalorder %s24, 1
        %s369 = scalar_select %p368, %s24, 1
        %s370 = smul.addr %s369, 4
        %s371 = scalar_lea.vmem %s1, %s370
        %v373 = vld [vmem:[%s4] sm:$0x1]
        %v374 = vld [vmem:[%s5] sm:$0x1]
        %v375 = vld [vmem:[%s367] sm:$0xff]
        %v376 = vld [vmem:[%s371] sm:$0xf]
        %v377 = vld [vmem:[%s2] sm:$0xf]
        %v378 = vld [vmem:[%s2 + $0x4] sm:$0xf]
        %v379 = vld [vmem:[%s2 + $0x8] sm:$0xf]
        %v380 = vld [vmem:[%s2 + $0xc] sm:$0xf]
        %v381 = vld [vmem:[%s3] sm:$0x1]
        %v383 = vlaneseq
        %v384 = vshrl.u32 %v383, 7
        %v385 = vsub.s32 0, %v384
        %v386 = vrot.slane %v381, %v385
        %v392 = vunpack.c.l.b16 %v377
        %v393 = vunpack.c.l.b16 %v378
        %v394 = vunpack.c.l.b16 %v379
        %v395 = vunpack.c.l.b16 %v380
        %v396 = vpack.c.b16 %v393, %v392
        %v397 = vpack.c.b16 %v395, %v394
        %vm400 = vcmask 261120
        %v402 = vsel %vm400, %v376, 0
        %404 = vmatprep.subr.bf16.mxu0 0
        %405 = vmatpush1.bf16.msra.mxu0 %v396
        %406 = vmatprep.subr.bf16.mxu0 0
        %407 = vmatpush1.bf16.msra.mxu0 %v397
        %408 = vmatprep.subr.bf16.mxu0 0
        %409 = vmatpush1.bf16.msra.mxu0 0
        %410 = vmatprep.subr.bf16.mxu0 0
        %411 = vmatpush1.bf16.msra.mxu0 0
        %412 = vmatprep.subr.bf16.mxu0 0
        %413 = vmatpush1.bf16.msra.mxu0 0
        %414 = vmatprep.subr.bf16.mxu0 0
        %415 = vmatpush1.bf16.msra.mxu0 0
        %416 = vmatprep.subr.bf16.mxu0 0
        %417 = vmatpush1.bf16.msra.mxu0 0
        %418 = vmatprep.subr.bf16.mxu0 0
        %419 = vmatpush1.bf16.msra.mxu0 0
        %420 = vmatprep.subr.bf16.mxu0 0
        %421 = vmatpush1.bf16.msra.mxu0 0
        %422 = vmatprep.subr.bf16.mxu0 0
        %423 = vmatpush1.bf16.msra.mxu0 0
        %424 = vmatprep.subr.bf16.mxu0 0
        %425 = vmatpush1.bf16.msra.mxu0 0
        %426 = vmatprep.subr.bf16.mxu0 0
        %427 = vmatpush1.bf16.msra.mxu0 0
        %428 = vmatprep.subr.bf16.mxu0 0
        %429 = vmatpush1.bf16.msra.mxu0 0
        %430 = vmatprep.subr.bf16.mxu0 0
        %431 = vmatpush1.bf16.msra.mxu0 0
        %432 = vmatprep.subr.bf16.mxu0 0
        %433 = vmatpush1.bf16.msra.mxu0 0
        %434 = vmatprep.subr.bf16.mxu0 0
        %435 = vmatpush1.bf16.msra.mxu0 0
        %436 = vmatprep.mubr.bf16.mxu0 0
        %437 = vmatmul.mubr.bf16.gmra.mrb[0].mxu0 %v402
        %v438 = vpop.f32.mrb[0].mxu0
        %v439 = vadd.f32 %v386, %v438
        %v440 = vpop.f32.mrb[0].mxu0
        %v441 = vpop.f32.mrb[0].mxu0
        %v442 = vpop.f32.mrb[0].mxu0
        %443 = vdwg.mxu0
        %v444 = vadd.f32 %v375, %v439
        %v445 = vsel %vm400, %v444, 0.0
        %446 = vadd.xlane.f32.xlu0 %v445
        %v447 = vpop.xlane.xlu0 %446
        %v448 = vrcp.pop 32.0
        %v449 = vmul.f32 %v447, %v448
        %v450 = vsub.f32 %v444, %v449
        %v451 = vmul.f32 %v450, %v450
        %v452 = vsel %vm400, %v451, 0.0
        %453 = vadd.xlane.f32.xlu0 %v452
        %v454 = vpop.xlane.xlu0 %453
        %v455 = vmul.f32 %v454, %v448
        %v456 = vadd.f32 %v455, 1e-05
        %v457 = vrsqrt.pop %v456
        %v458 = vmul.f32 %v450, %v457
        %v460 = vlaneseq
        %v461 = vshrl.u32 %v460, 7
        %v462 = vsub.s32 0, %v461
        %v463 = vrot.slane %v373, %v462
        %v465 = vmul.f32 %v458, %v463
        %v467 = vlaneseq
        %v468 = vshrl.u32 %v467, 7
        %v469 = vsub.s32 0, %v468
        %v470 = vrot.slane %v374, %v469
        %v472 = vadd.f32 %v465, %v470
        %v473 = vpack.c.bf16 %v472, %v472
        %v474 = vld [vmem:[%s6] sm:$0xf]
        %v475 = vld [vmem:[%s6 + $0x4] sm:$0xf]
        %v476 = vld [vmem:[%s6 + $0x8] sm:$0xf]
        %v477 = vld [vmem:[%s6 + $0xc] sm:$0xf]
        %v478 = vld [vmem:[%s7] sm:$0x1]
        %v480 = vlaneseq
        %v481 = vshrl.u32 %v480, 7
        %v482 = vsub.s32 0, %v481
        %v483 = vrot.slane %v478, %v482
        %v489 = vunpack.c.l.b16 %v474
        %v490 = vunpack.c.l.b16 %v475
        %v491 = vunpack.c.l.b16 %v476
        %v492 = vunpack.c.l.b16 %v477
        %v493 = vpack.c.b16 %v490, %v489
        %v494 = vpack.c.b16 %v492, %v491
        %v498 = vsel %vm400, %v473, 0
        %500 = vmatprep.subr.bf16.mxu0 0
        %501 = vmatpush1.bf16.msra.mxu0 %v493
        %502 = vmatprep.subr.bf16.mxu0 0
        %503 = vmatpush1.bf16.msra.mxu0 %v494
        %504 = vmatprep.subr.bf16.mxu0 0
        %505 = vmatpush1.bf16.msra.mxu0 0
        %506 = vmatprep.subr.bf16.mxu0 0
        %507 = vmatpush1.bf16.msra.mxu0 0
        %508 = vmatprep.subr.bf16.mxu0 0
        %509 = vmatpush1.bf16.msra.mxu0 0
        %510 = vmatprep.subr.bf16.mxu0 0
        %511 = vmatpush1.bf16.msra.mxu0 0
        %512 = vmatprep.subr.bf16.mxu0 0
        %513 = vmatpush1.bf16.msra.mxu0 0
        %514 = vmatprep.subr.bf16.mxu0 0
        %515 = vmatpush1.bf16.msra.mxu0 0
        %516 = vmatprep.subr.bf16.mxu0 0
        %517 = vmatpush1.bf16.msra.mxu0 0
        %518 = vmatprep.subr.bf16.mxu0 0
        %519 = vmatpush1.bf16.msra.mxu0 0
        %520 = vmatprep.subr.bf16.mxu0 0
        %521 = vmatpush1.bf16.msra.mxu0 0
        %522 = vmatprep.subr.bf16.mxu0 0
        %523 = vmatpush1.bf16.msra.mxu0 0
        %524 = vmatprep.subr.bf16.mxu0 0
        %525 = vmatpush1.bf16.msra.mxu0 0
        %526 = vmatprep.subr.bf16.mxu0 0
        %527 = vmatpush1.bf16.msra.mxu0 0
        %528 = vmatprep.subr.bf16.mxu0 0
        %529 = vmatpush1.bf16.msra.mxu0 0
        %530 = vmatprep.subr.bf16.mxu0 0
        %531 = vmatpush1.bf16.msra.mxu0 0
        %532 = vmatprep.mubr.bf16.mxu0 0
        %533 = vmatmul.mubr.bf16.gmra.mrb[0].mxu0 %v498
        %v534 = vpop.f32.mrb[0].mxu0
        %v535 = vadd.f32 %v483, %v534
        %v536 = vpop.f32.mrb[0].mxu0
        %v537 = vpop.f32.mrb[0].mxu0
        %v538 = vpop.f32.mrb[0].mxu0
        %539 = vdwg.mxu0
        %v540 = vmul.f32 %v535, 0.5
        %v541 = vmul.f32 %v535, 0.70710677
        %v542 = verf.f32.pop %v541
        %v543 = vadd.f32 %v542, 1.0
        %v544 = vmul.f32 %v540, %v543
        %v545 = vpack.c.bf16 %v544, %v544
        %v546 = vld [vmem:[%s8] sm:$0xf]
        %v547 = vld [vmem:[%s8 + $0x4] sm:$0xf]
        %v548 = vld [vmem:[%s8 + $0x8] sm:$0xf]
        %v549 = vld [vmem:[%s8 + $0xc] sm:$0xf]
        %v550 = vld [vmem:[%s8 + $0x10] sm:$0xf]
        %v551 = vld [vmem:[%s8 + $0x14] sm:$0xf]
        %v552 = vld [vmem:[%s8 + $0x18] sm:$0xf]
        %v553 = vld [vmem:[%s8 + $0x1c] sm:$0xf]
        %v554 = vld [vmem:[%s8 + $0x20] sm:$0xf]
        %v555 = vld [vmem:[%s8 + $0x24] sm:$0xf]
        %v556 = vld [vmem:[%s8 + $0x28] sm:$0xf]
        %v557 = vld [vmem:[%s8 + $0x2c] sm:$0xf]
        %v558 = vld [vmem:[%s8 + $0x30] sm:$0xf]
        %v559 = vld [vmem:[%s8 + $0x34] sm:$0xf]
        %v560 = vld [vmem:[%s8 + $0x38] sm:$0xf]
        %v561 = vld [vmem:[%s8 + $0x3c] sm:$0xf]
        %v562 = vld [vmem:[%s9] sm:$0x1]
        %v564 = vlaneseq
        %v565 = vshrl.u32 %v564, 7
        %v566 = vsub.s32 0, %v565
        %v567 = vrot.slane %v562, %v566
        %v585 = vunpack.c.l.b16 %v546
        %v586 = vunpack.c.l.b16 %v547
        %v587 = vunpack.c.l.b16 %v548
        %v588 = vunpack.c.l.b16 %v549
        %v589 = vunpack.c.l.b16 %v550
        %v590 = vunpack.c.l.b16 %v551
        %v591 = vunpack.c.l.b16 %v552
        %v592 = vunpack.c.l.b16 %v553
        %v593 = vunpack.c.l.b16 %v554
        %v594 = vunpack.c.l.b16 %v555
        %v595 = vunpack.c.l.b16 %v556
        %v596 = vunpack.c.l.b16 %v557
        %v597 = vunpack.c.l.b16 %v558
        %v598 = vunpack.c.l.b16 %v559
        %v599 = vunpack.c.l.b16 %v560
        %v600 = vunpack.c.l.b16 %v561
        %v601 = vpack.c.b16 %v586, %v585
        %v602 = vpack.c.b16 %v588, %v587
        %v603 = vpack.c.b16 %v590, %v589
        %v604 = vpack.c.b16 %v592, %v591
        %v605 = vpack.c.b16 %v594, %v593
        %v606 = vpack.c.b16 %v596, %v595
        %v607 = vpack.c.b16 %v598, %v597
        %v608 = vpack.c.b16 %v600, %v599
        %617 = vmatprep.subr.bf16.mxu0 0
        %618 = vmatpush1.bf16.msra.mxu0 %v601
        %619 = vmatprep.subr.bf16.mxu0 0
        %620 = vmatpush1.bf16.msra.mxu0 %v602
        %621 = vmatprep.subr.bf16.mxu0 0
        %622 = vmatpush1.bf16.msra.mxu0 %v603
        %623 = vmatprep.subr.bf16.mxu0 0
        %624 = vmatpush1.bf16.msra.mxu0 %v604
        %625 = vmatprep.subr.bf16.mxu0 0
        %626 = vmatpush1.bf16.msra.mxu0 %v605
        %627 = vmatprep.subr.bf16.mxu0 0
        %628 = vmatpush1.bf16.msra.mxu0 %v606
        %629 = vmatprep.subr.bf16.mxu0 0
        %630 = vmatpush1.bf16.msra.mxu0 %v607
        %631 = vmatprep.subr.bf16.mxu0 0
        %632 = vmatpush1.bf16.msra.mxu0 %v608
        %633 = vmatprep.subr.bf16.mxu0 0
        %634 = vmatpush1.bf16.msra.mxu0 0
        %635 = vmatprep.subr.bf16.mxu0 0
        %636 = vmatpush1.bf16.msra.mxu0 0
        %637 = vmatprep.subr.bf16.mxu0 0
        %638 = vmatpush1.bf16.msra.mxu0 0
        %639 = vmatprep.subr.bf16.mxu0 0
        %640 = vmatpush1.bf16.msra.mxu0 0
        %641 = vmatprep.subr.bf16.mxu0 0
        %642 = vmatpush1.bf16.msra.mxu0 0
        %643 = vmatprep.subr.bf16.mxu0 0
        %644 = vmatpush1.bf16.msra.mxu0 0
        %645 = vmatprep.subr.bf16.mxu0 0
        %646 = vmatpush1.bf16.msra.mxu0 0
        %647 = vmatprep.subr.bf16.mxu0 0
        %648 = vmatpush1.bf16.msra.mxu0 0
        %649 = vmatprep.mubr.bf16.mxu0 0
        %650 = vmatmul.mubr.bf16.gmra.mrb[0].mxu0 %v545
        %v651 = vpop.f32.mrb[0].mxu0
        %v652 = vadd.f32 %v567, %v651
        %v653 = vpop.f32.mrb[0].mxu0
        %v654 = vpop.f32.mrb[0].mxu0
        %v655 = vpop.f32.mrb[0].mxu0
        %656 = vdwg.mxu0
        %v657 = vadd.f32 %v472, %v652
        %v658 = vsel %vm400, %v657, 0.0
        %659 = vadd.xlane.f32.xlu0 %v658
        %v660 = vpop.xlane.xlu0 %659
        %v661 = vmul.f32 %v660, %v448
        %v662 = vsub.f32 %v657, %v661
        %v663 = vmul.f32 %v662, %v662
        %v664 = vsel %vm400, %v663, 0.0
        %665 = vadd.xlane.f32.xlu0 %v664
        %v666 = vpop.xlane.xlu0 %665
        %v667 = vmul.f32 %v666, %v448
        %v668 = vadd.f32 %v667, 1e-05
        %v669 = vrsqrt.pop %v668
        %v670 = vmul.f32 %v662, %v669
        %v671 = vmul.f32 %v670, %v463
        %v672 = vadd.f32 %v671, %v470
        %673 = vst.msk [vmem:[%s363] sm:$0xff] %vm400, %v672
        %s674 = sand.u32 %s252, 1
        %s675 = scalar_lea.sflag [#allocation3], %s674
        %s676 = sand.u32 %s252, 1
        %s677 = smul.addr %s676, 8
        %s678 = scalar_lea.vmem [#allocation2], %s677
        // Predicated region
        $region61: #{transformer_encode_block.5} parent=59 // pred_check
          %p679 = pneg %p262
        $region62: #{transformer_encode_block.5} parent=59 // pred_check_branch
          %681 = sbr.rel (%p679) target = $region64
        $region63: #{transformer_encode_block.5} parent=59 // pred_region
          %s683 = ssub.s32 128, 128
          %684 = vsyncadd %s675, %s683
          %s685 = smul.addr %s24, 128
          %s686 = scalar_lea.hbm %s10, %s685
          %s688 = sshll.u32 %s678, 4
          %s689 = int_to_ptr.vmem [resolvable:$true] %s688
          %691 = dma.vmem_to_hbm [thread:$0]  %s689, 128, %s686, %s675
        $region64: #{transformer_encode_block.5} parent=59 // pred_fallthru
          _
      $region60: #{transformer_encode_block.5} parent=5 // pred_fallthru
        _
      %p692 = scmp.le.s32.totalorder 2, %s19
      // Predicated region
      $region65: #{transformer_encode_block.5} parent=5 // pred_check
        %p693 = pneg %p692
      $region66: #{transformer_encode_block.5} parent=5 // pred_check_branch
        %695 = sbr.rel (%p693) target = $region68
      $region67: #{transformer_encode_block.5} parent=5 // pred_region
        %s696 = ssub.s32 %s19, 2
        // Predicated region
        $region69: #{transformer_encode_block.5} parent=67 // pred_check
          %p697 = pneg %p268
        $region70: #{transformer_encode_block.5} parent=67 // pred_check_branch
          %699 = sbr.rel (%p697) target = $region72
        $region71: #{transformer_encode_block.5} parent=67 // pred_region
          %s700 = sand.u32 %s253, 1
          %s701 = scalar_lea.sflag [#allocation3], %s700
          %s702 = sand.u32 %s253, 1
          %s703 = smul.addr %s702, 8
          %s704 = scalar_lea.vmem [#allocation2], %s703
          %705 = dma.done %s701, 128
        $region72: #{transformer_encode_block.5} parent=67 // pred_fallthru
          _
      $region68: #{transformer_encode_block.5} parent=5 // pred_fallthru
        _
    $region6: #{transformer_encode_block.5} parent=1 // loop_footer
      %s23 = sadd.s32 1, %s19
    $region7: #{transformer_encode_block.5} parent=1 // loop_footer_branch
      %18 = sbr.rel target = $region3
    $region8: #{transformer_encode_block.5} parent=1 // loop_exit
      _
    %706 = vsyncpa [#allocation3], 1
    %s707 = scalar_lea.sflag [#allocation3], 1
    %708 = vsyncpa %s707, 1

</llo_original>
